<compile_context>
chip_gen: v7x
topology: tpu7x:2x2x1
jax: 0.10.0
libtpu: 0.0.40
codegen_flags: <defaults>
</compile_context>

<pallas_src>
import functools

import jax
import jax.numpy as jnp
from jax import lax
from jax.experimental import pallas as pl
from jax.experimental.pallas import tpu as pltpu

BN_EPS = 1e-5
_VMEM_LIMIT = 32 * 1024 * 1024   # comfortable on v5e/v6e (128 MiB) and v7x (64 MiB)
_MAX_TILE_N = 8                  # batch elements per grid step (statically unrolled)


# ---------------------------------------------------------------------------
# kernel helpers
# ---------------------------------------------------------------------------
def _silu(h):
    # exp + reciprocal estimate run on the EUP slot, keeping the VALU slots free.
    return h * pl.reciprocal(1.0 + jnp.exp(-h))


def _lane_masks(length):
    lane = lax.broadcasted_iota(jnp.int32, (1, length), 1)
    return lane == 0, lane == length - 1


def _conv3(v, w_ref, b_ref, first_mask, last_mask):
    """'same' k=3 conv of one (C, L) slab.

    w_ref is either (Co, 3*C) stacked taps (fused single MXU matmul; used when C
    is sublane-aligned) or (3, Co, C) (one matmul per tap).  Tap k multiplies
    v[:, l + k - 1]; the lane masks zero the wrapped column (padding=1 semantics).
    """
    _, ell = v.shape
    vm1 = jnp.where(first_mask, 0.0, pltpu.roll(v, shift=1, axis=1))        # v[:, l-1]
    vp1 = jnp.where(last_mask, 0.0, pltpu.roll(v, shift=ell - 1, axis=1))   # v[:, l+1]
    if len(w_ref.shape) == 2:
        stacked = jnp.concatenate([vm1, v, vp1], axis=0)                    # (3C, L)
        y = jnp.dot(w_ref[...], stacked, preferred_element_type=jnp.float32)
    else:
        y = (jnp.dot(w_ref[0], vm1, preferred_element_type=jnp.float32)
             + jnp.dot(w_ref[1], v, preferred_element_type=jnp.float32)
             + jnp.dot(w_ref[2], vp1, preferred_element_type=jnp.float32))
    return y + b_ref[...]


# ---------------------------------------------------------------------------
# pass 1: per-channel sum / sum-of-squares of SiLU(conv1(x)) over (N, L)
# ---------------------------------------------------------------------------
def _stats_kernel(x_ref, w1_ref, b1_ref, sum_ref, sq_ref):
    @pl.when(pl.program_id(0) == 0)
    def _():
        sum_ref[...] = jnp.zeros_like(sum_ref)
        sq_ref[...] = jnp.zeros_like(sq_ref)

    tn, _, ell = x_ref.shape
    first, last = _lane_masks(ell)
    acc_s = jnp.zeros(sum_ref.shape, jnp.float32)
    acc_q = jnp.zeros(sq_ref.shape, jnp.float32)
    for n in range(tn):                            # static unroll, tn <= _MAX_TILE_N
        h = _silu(_conv3(x_ref[n], w1_ref, b1_ref, first, last))
        acc_s = acc_s + jnp.sum(h, axis=1, keepdims=True)
        acc_q = acc_q + jnp.sum(h * h, axis=1, keepdims=True)
    sum_ref[...] += acc_s
    sq_ref[...] += acc_q


# ---------------------------------------------------------------------------
# pass 2: BN (as per-channel scale/shift) -> conv2 -> + projection
# ---------------------------------------------------------------------------
def _apply_kernel(inv_count, has_proj, x_ref, sum_ref, sq_ref, w1_ref, b1_ref,
                  g_ref, bt_ref, w2_ref, b2_ref, *rest):
    if has_proj:
        wp_ref, bp_ref, o_ref = rest
    else:
        (o_ref,) = rest

    tn, _, ell = x_ref.shape
    first, last = _lane_masks(ell)

    # Fold train-mode BatchNorm (batch statistics, biased variance) into a
    # per-channel scale/shift (hoisted out of the batch loop).
    mean = sum_ref[...] * inv_count                     # (Co, 1)
    var = sq_ref[...] * inv_count - mean * mean
    scale = g_ref[...] * lax.rsqrt(var + BN_EPS)        # (Co, 1)
    shift = bt_ref[...] - mean * scale

    for n in range(tn):                            # static unroll, tn <= _MAX_TILE_N
        x_n = x_ref[n]
        h = _silu(_conv3(x_n, w1_ref, b1_ref, first, last))
        h = h * scale + shift
        y = _conv3(h, w2_ref, b2_ref, first, last)
        if has_proj:
            y = y + jnp.dot(wp_ref[...], x_n,
                            preferred_element_type=jnp.float32) + bp_ref[...]
        else:
            y = y + x_n                            # Identity projection (Ci == Co)
        o_ref[n] = y.astype(o_ref.dtype)


# ---------------------------------------------------------------------------
# wrapper
# ---------------------------------------------------------------------------
def _conv_weight(w):
    """(Co, Cin, 3) PyTorch conv weight -> kernel layout."""
    co, cin, _ = w.shape
    if cin % 8 == 0:   # sublane-aligned: fuse the 3 taps into one deep matmul
        return jnp.transpose(w, (0, 2, 1)).reshape(co, 3 * cin)   # (Co, 3*Cin)
    return jnp.transpose(w, (2, 0, 1))                            # (3, Co, Cin)


def _const_spec(shape):
    rank = len(shape)
    return pl.BlockSpec(shape, lambda *_, _r=rank: (0,) * _r)


def _pick_tile_n(n, ci, co, ell):
    budget = 1 << 20                               # ~1 MiB of activations per step
    per_elem = 4 * ell * max(ci, co)
    tn = int(max(1, min(n, _MAX_TILE_N, budget // max(per_elem, 1))))
    while n % tn:
        tn -= 1
    return tn


def residual_forward(x_ncl, params, tile_n=None):
    """x_ncl: (N, C_in, L) float32 -> (N, C_out, L) float32 (NCL, like nn.Conv1d)."""
    n, ci, ell = x_ncl.shape
    w1, b1 = params["w1"], params["b1"]
    w2, b2 = params["w2"], params["b2"]
    co = w1.shape[0]
    has_proj = params["wp"] is not None

    w1_k = _conv_weight(w1)
    w2_k = _conv_weight(w2)
    b1_2 = b1.reshape(co, 1)
    b2_2 = b2.reshape(co, 1)
    g_2 = params["gamma"].reshape(co, 1)
    bt_2 = params["beta"].reshape(co, 1)

    tn = _pick_tile_n(n, ci, co, ell) if tile_n is None else tile_n
    assert n % tn == 0, "batch tile must divide N"
    grid = (n // tn,)
    x_spec = pl.BlockSpec((tn, ci, ell), lambda i: (i, 0, 0))

    # ---- pass 1: BN statistics (accumulator output, "arbitrary" grid axis) ----
    s_sum, s_sq = pl.pallas_call(
        _stats_kernel,
        out_shape=(jax.ShapeDtypeStruct((co, 1), jnp.float32),
                   jax.ShapeDtypeStruct((co, 1), jnp.float32)),
        grid=grid,
        in_specs=[x_spec, _const_spec(w1_k.shape), _const_spec(b1_2.shape)],
        out_specs=(_const_spec((co, 1)), _const_spec((co, 1))),
        compiler_params=pltpu.CompilerParams(
            dimension_semantics=("arbitrary",), vmem_limit_bytes=_VMEM_LIMIT),
    )(x_ncl, w1_k, b1_2)

    # ---- pass 2: full residual block, pipelined & "parallel" over batch tiles ----
    ins = [x_ncl, s_sum, s_sq, w1_k, b1_2, g_2, bt_2, w2_k, b2_2]
    in_specs = [x_spec, _const_spec(s_sum.shape), _const_spec(s_sq.shape),
                _const_spec(w1_k.shape), _const_spec(b1_2.shape),
                _const_spec(g_2.shape), _const_spec(bt_2.shape),
                _const_spec(w2_k.shape), _const_spec(b2_2.shape)]
    if has_proj:
        wp_2 = params["wp"][:, :, 0]               # (Co, Ci)
        bp_2 = params["bp"].reshape(co, 1)
        ins += [wp_2, bp_2]
        in_specs += [_const_spec(wp_2.shape), _const_spec(bp_2.shape)]

    return pl.pallas_call(
        functools.partial(_apply_kernel, 1.0 / float(n * ell), has_proj),
        out_shape=jax.ShapeDtypeStruct((n, co, ell), jnp.float32),
        grid=grid,
        in_specs=in_specs,
        out_specs=pl.BlockSpec((tn, co, ell), lambda i: (i, 0, 0)),
        compiler_params=pltpu.CompilerParams(
            dimension_semantics=("parallel",), vmem_limit_bytes=_VMEM_LIMIT),
    )(*ins)


# ---------------------------------------------------------------------------
# deterministic parameter init + pure-JAX reference for verification
# ---------------------------------------------------------------------------
def make_params(key, dim_in, dim_out):
    ks = jax.random.split(key, 8)
    p = {
        "w1": 0.3 * jax.random.normal(ks[0], (dim_out, dim_in, 3), jnp.float32),
        "b1": 0.1 * jax.random.normal(ks[1], (dim_out,), jnp.float32),
        "gamma": 1.0 + 0.1 * jax.random.normal(ks[2], (dim_out,), jnp.float32),
        "beta": 0.1 * jax.random.normal(ks[3], (dim_out,), jnp.float32),
        "w2": 0.3 * jax.random.normal(ks[4], (dim_out, dim_out, 3), jnp.float32),
        "b2": 0.1 * jax.random.normal(ks[5], (dim_out,), jnp.float32),
    }
    if dim_in == dim_out:
        p["wp"], p["bp"] = None, None
    else:
        p["wp"] = 0.3 * jax.random.normal(ks[6], (dim_out, dim_in, 1), jnp.float32)
        p["bp"] = 0.1 * jax.random.normal(ks[7], (dim_out,), jnp.float32)
    return p


def reference(x, p):
    def conv1d(x, w, b, pad):
        y = lax.conv_general_dilated(
            x, w, (1,), [(pad, pad)],
            dimension_numbers=("NCH", "OIH", "NCH"),
            precision=lax.Precision.HIGHEST)
        return y + b[None, :, None]

    h = conv1d(x, p["w1"], p["b1"], 1)
    h = h * jax.nn.sigmoid(h)
    mean = jnp.mean(h, axis=(0, 2), keepdims=True)
    var = jnp.mean((h - mean) ** 2, axis=(0, 2), keepdims=True)
    h = (h - mean) / jnp.sqrt(var + BN_EPS)
    h = h * p["gamma"][None, :, None] + p["beta"][None, :, None]
    h = conv1d(h, p["w2"], p["b2"], 1)
    proj = x if p["wp"] is None else conv1d(x, p["wp"], p["bp"], 0)
    return h + proj


if __name__ == "__main__":
    key = jax.random.PRNGKey(0)
    k_x1, k_p1, k_x2, k_p2 = jax.random.split(key, 4)

    # case 1: dim_in (57, per the module docstring) != dim_out -> Conv1d(k=1) proj.
    # tile_n=2 with N=4 exercises the multi-step grid (stats accumulation + pipeline).
    x1 = jax.random.normal(k_x1, (4, 57, 128), jnp.float32)     # (N, C_in, L)
    p1 = make_params(k_p1, 57, 64)
    out1 = jax.block_until_ready(residual_forward(x1, p1, tile_n=2))
    ref1 = reference(x1, p1)
    assert out1.shape == (4, 64, 128)
    assert jnp.allclose(out1, ref1, rtol=2e-3, atol=2e-3), "mismatch (proj conv case)"

    # case 2: dim_in == dim_out -> Identity projection, fully fused tap matmuls.
    x2 = jax.random.normal(k_x2, (4, 64, 128), jnp.float32)
    p2 = make_params(k_p2, 64, 64)
    out2 = jax.block_until_ready(residual_forward(x2, p2, tile_n=2))
    ref2 = reference(x2, p2)
    assert out2.shape == (4, 64, 128)
    assert jnp.allclose(out2, ref2, rtol=2e-3, atol=2e-3), "mismatch (identity case)"

    print("KERNEL_OK")
</pallas_src>

<mosaic_0001>
module attributes {stable_mosaic.version = 11 : i64} {
  func.func @_stats_kernel(%arg0: i32, %arg1: memref<2x57x128xf32, #tpu.memory_space<vmem>>, %arg2: memref<3x64x57xf32, #tpu.memory_space<vmem>>, %arg3: memref<64x1xf32, #tpu.memory_space<vmem>>, %arg4: memref<64x1xf32, #tpu.memory_space<vmem>>, %arg5: memref<64x1xf32, #tpu.memory_space<vmem>>) attributes {dimension_semantics = [#tpu.dimension_semantics<arbitrary>], iteration_bounds = array<i64: 2>, scalar_prefetch = 0 : i64, scratch_operands = 0 : i64, tpu.core_type = #tpu.core_type<tc>, window_params = [{transform_indices = @transform_0, window_bounds = array<i64: 2, 57, 128>}, {pipeline_mode = #tpu.pipeline_mode<synchronous>, transform_indices = @transform_1, window_bounds = array<i64: 3, 64, 57>}, {pipeline_mode = #tpu.pipeline_mode<synchronous>, transform_indices = @transform_2, window_bounds = array<i64: 64, 1>}, {pipeline_mode = #tpu.pipeline_mode<synchronous>, transform_indices = @transform_3, window_bounds = array<i64: 64, 1>}, {pipeline_mode = #tpu.pipeline_mode<synchronous>, transform_indices = @transform_4, window_bounds = array<i64: 64, 1>}]} {
    %c0_i32 = arith.constant 0 : i32
    %0 = arith.cmpi eq, %arg0, %c0_i32 : i32
    %1 = arith.extui %0 : i1 to i32
    %c0_i32_0 = arith.constant 0 : i32
    %2 = arith.cmpi ne, %1, %c0_i32_0 : i32
    scf.if %2 {
      %cst_57 = arith.constant 0.000000e+00 : f32
      %96 = vector.broadcast %cst_57 : f32 to vector<64x1xf32>
      %c0_58 = arith.constant 0 : index
      %c0_59 = arith.constant 0 : index
      %97 = vector.load %arg4[%c0_58, %c0_59] : memref<64x1xf32, #tpu.memory_space<vmem>>, vector<64x1xf32>
      tpu.vector_store %arg4[%c0_58, %c0_59], %96 {strides = array<i32>} : memref<64x1xf32, #tpu.memory_space<vmem>>, vector<64x1xf32>,
      %cst_60 = arith.constant 0.000000e+00 : f32
      %98 = vector.broadcast %cst_60 : f32 to vector<64x1xf32>
      %c0_61 = arith.constant 0 : index
      %c0_62 = arith.constant 0 : index
      %99 = vector.load %arg5[%c0_61, %c0_62] : memref<64x1xf32, #tpu.memory_space<vmem>>, vector<64x1xf32>
      tpu.vector_store %arg5[%c0_61, %c0_62], %98 {strides = array<i32>} : memref<64x1xf32, #tpu.memory_space<vmem>>, vector<64x1xf32>,
    } else {
    }
    %3 = tpu.iota {dimensions = array<i32: 1>} : vector<1x128xi32>
    %c0_i32_1 = arith.constant 0 : i32
    %4 = vector.broadcast %c0_i32_1 : i32 to vector<1x128xi32>
    %5 = arith.cmpi eq, %3, %4 : vector<1x128xi32>
    %c127_i32 = arith.constant 127 : i32
    %6 = vector.broadcast %c127_i32 : i32 to vector<1x128xi32>
    %7 = arith.cmpi eq, %3, %6 : vector<1x128xi32>
    %cst = arith.constant 0.000000e+00 : f32
    %8 = vector.broadcast %cst : f32 to vector<64x1xf32>
    %cst_2 = arith.constant 0.000000e+00 : f32
    %9 = vector.broadcast %cst_2 : f32 to vector<64x1xf32>
    %c0 = arith.constant 0 : index
    %c0_3 = arith.constant 0 : index
    %c0_4 = arith.constant 0 : index
    %10 = vector.load %arg1[%c0, %c0_3, %c0_4] : memref<2x57x128xf32, #tpu.memory_space<vmem>>, vector<1x57x128xf32>
    %11 = vector.shape_cast %10 : vector<1x57x128xf32> to vector<57x128xf32>
    %c1_i32 = arith.constant 1 : i32
    %12 = tpu.dynamic_rotate %11 by %c1_i32 dim 1 : vector<57x128xf32>, i32 -> vector<57x128xf32>
    %cst_5 = arith.constant 0.000000e+00 : f32
    %13 = vector.shape_cast %5 : vector<1x128xi1> to vector<1x128xi1>
    %14 = vector.broadcast %13 : vector<1x128xi1> to vector<57x128xi1>
    %15 = vector.broadcast %cst_5 : f32 to vector<57x128xf32>
    %16 = arith.select %14, %15, %12 : vector<57x128xi1>, vector<57x128xf32>
    %c127_i32_6 = arith.constant 127 : i32
    %17 = tpu.dynamic_rotate %11 by %c127_i32_6 dim 1 : vector<57x128xf32>, i32 -> vector<57x128xf32>
    %cst_7 = arith.constant 0.000000e+00 : f32
    %18 = vector.shape_cast %7 : vector<1x128xi1> to vector<1x128xi1>
    %19 = vector.broadcast %18 : vector<1x128xi1> to vector<57x128xi1>
    %20 = vector.broadcast %cst_7 : f32 to vector<57x128xf32>
    %21 = arith.select %19, %20, %17 : vector<57x128xi1>, vector<57x128xf32>
    %c0_8 = arith.constant 0 : index
    %c0_9 = arith.constant 0 : index
    %c0_10 = arith.constant 0 : index
    %22 = vector.load %arg2[%c0_8, %c0_9, %c0_10] : memref<3x64x57xf32, #tpu.memory_space<vmem>>, vector<1x64x57xf32>
    %23 = vector.shape_cast %22 : vector<1x64x57xf32> to vector<64x57xf32>
    %cst_11 = arith.constant dense<0.000000e+00> : vector<64x128xf32>
    %24 = tpu.matmul %23, %16, %cst_11 {dimension_numbers = #tpu.dot_dimension_numbers<[1], [0], [0], [1], [0, 0, 1, 1], [], []>} : vector<64x57xf32>, vector<57x128xf32>, vector<64x128xf32> -> vector<64x128xf32>
    %c1 = arith.constant 1 : index
    %c0_12 = arith.constant 0 : index
    %c0_13 = arith.constant 0 : index
    %25 = vector.load %arg2[%c1, %c0_12, %c0_13] : memref<3x64x57xf32, #tpu.memory_space<vmem>>, vector<1x64x57xf32>
    %26 = vector.shape_cast %25 : vector<1x64x57xf32> to vector<64x57xf32>
    %cst_14 = arith.constant dense<0.000000e+00> : vector<64x128xf32>
    %27 = tpu.matmul %26, %11, %cst_14 {dimension_numbers = #tpu.dot_dimension_numbers<[1], [0], [0], [1], [0, 0, 1, 1], [], []>} : vector<64x57xf32>, vector<57x128xf32>, vector<64x128xf32> -> vector<64x128xf32>
    %28 = arith.addf %24, %27 : vector<64x128xf32>
    %c2 = arith.constant 2 : index
    %c0_15 = arith.constant 0 : index
    %c0_16 = arith.constant 0 : index
    %29 = vector.load %arg2[%c2, %c0_15, %c0_16] : memref<3x64x57xf32, #tpu.memory_space<vmem>>, vector<1x64x57xf32>
    %30 = vector.shape_cast %29 : vector<1x64x57xf32> to vector<64x57xf32>
    %cst_17 = arith.constant dense<0.000000e+00> : vector<64x128xf32>
    %31 = tpu.matmul %30, %21, %cst_17 {dimension_numbers = #tpu.dot_dimension_numbers<[1], [0], [0], [1], [0, 0, 1, 1], [], []>} : vector<64x57xf32>, vector<57x128xf32>, vector<64x128xf32> -> vector<64x128xf32>
    %32 = arith.addf %28, %31 : vector<64x128xf32>
    %c0_18 = arith.constant 0 : index
    %c0_19 = arith.constant 0 : index
    %33 = vector.load %arg3[%c0_18, %c0_19] : memref<64x1xf32, #tpu.memory_space<vmem>>, vector<64x1xf32>
    %34 = vector.broadcast %33 : vector<64x1xf32> to vector<64x128xf32>
    %35 = arith.addf %32, %34 : vector<64x128xf32>
    %cst_20 = arith.constant 0.000000e+00 : f32
    %36 = vector.broadcast %cst_20 : f32 to vector<64x128xf32>
    %37 = arith.subf %36, %35 : vector<64x128xf32>
    %38 = math.exp %37 : vector<64x128xf32>
    %cst_21 = arith.constant 1.000000e+00 : f32
    %39 = vector.broadcast %cst_21 : f32 to vector<64x128xf32>
    %40 = arith.addf %39, %38 : vector<64x128xf32>
    %41 = tpu.reciprocal %40 : vector<64x128xf32> -> vector<64x128xf32>
    %42 = arith.mulf %35, %41 : vector<64x128xf32>
    %cst_22 = arith.constant dense<0.000000e+00> : vector<64xf32>
    %43 = vector.multi_reduction <add>, %42, %cst_22 [1] : vector<64x128xf32> to vector<64xf32>
    %44 = vector.shape_cast %43 : vector<64xf32> to vector<64x1xf32>
    %45 = arith.addf %8, %44 : vector<64x1xf32>
    %46 = arith.mulf %42, %42 : vector<64x128xf32>
    %cst_23 = arith.constant dense<0.000000e+00> : vector<64xf32>
    %47 = vector.multi_reduction <add>, %46, %cst_23 [1] : vector<64x128xf32> to vector<64xf32>
    %48 = vector.shape_cast %47 : vector<64xf32> to vector<64x1xf32>
    %49 = arith.addf %9, %48 : vector<64x1xf32>
    %c1_24 = arith.constant 1 : index
    %c0_25 = arith.constant 0 : index
    %c0_26 = arith.constant 0 : index
    %50 = vector.load %arg1[%c1_24, %c0_25, %c0_26] : memref<2x57x128xf32, #tpu.memory_space<vmem>>, vector<1x57x128xf32>
    %51 = vector.shape_cast %50 : vector<1x57x128xf32> to vector<57x128xf32>
    %c1_i32_27 = arith.constant 1 : i32
    %52 = tpu.dynamic_rotate %51 by %c1_i32_27 dim 1 : vector<57x128xf32>, i32 -> vector<57x128xf32>
    %cst_28 = arith.constant 0.000000e+00 : f32
    %53 = vector.shape_cast %5 : vector<1x128xi1> to vector<1x128xi1>
    %54 = vector.broadcast %53 : vector<1x128xi1> to vector<57x128xi1>
    %55 = vector.broadcast %cst_28 : f32 to vector<57x128xf32>
    %56 = arith.select %54, %55, %52 : vector<57x128xi1>, vector<57x128xf32>
    %c127_i32_29 = arith.constant 127 : i32
    %57 = tpu.dynamic_rotate %51 by %c127_i32_29 dim 1 : vector<57x128xf32>, i32 -> vector<57x128xf32>
    %cst_30 = arith.constant 0.000000e+00 : f32
    %58 = vector.shape_cast %7 : vector<1x128xi1> to vector<1x128xi1>
    %59 = vector.broadcast %58 : vector<1x128xi1> to vector<57x128xi1>
    %60 = vector.broadcast %cst_30 : f32 to vector<57x128xf32>
    %61 = arith.select %59, %60, %57 : vector<57x128xi1>, vector<57x128xf32>
    %c0_31 = arith.constant 0 : index
    %c0_32 = arith.constant 0 : index
    %c0_33 = arith.constant 0 : index
    %62 = vector.load %arg2[%c0_31, %c0_32, %c0_33] : memref<3x64x57xf32, #tpu.memory_space<vmem>>, vector<1x64x57xf32>
    %63 = vector.shape_cast %62 : vector<1x64x57xf32> to vector<64x57xf32>
    %cst_34 = arith.constant dense<0.000000e+00> : vector<64x128xf32>
    %64 = tpu.matmul %63, %56, %cst_34 {dimension_numbers = #tpu.dot_dimension_numbers<[1], [0], [0], [1], [0, 0, 1, 1], [], []>} : vector<64x57xf32>, vector<57x128xf32>, vector<64x128xf32> -> vector<64x128xf32>
    %c1_35 = arith.constant 1 : index
    %c0_36 = arith.constant 0 : index
    %c0_37 = arith.constant 0 : index
    %65 = vector.load %arg2[%c1_35, %c0_36, %c0_37] : memref<3x64x57xf32, #tpu.memory_space<vmem>>, vector<1x64x57xf32>
    %66 = vector.shape_cast %65 : vector<1x64x57xf32> to vector<64x57xf32>
    %cst_38 = arith.constant dense<0.000000e+00> : vector<64x128xf32>
    %67 = tpu.matmul %66, %51, %cst_38 {dimension_numbers = #tpu.dot_dimension_numbers<[1], [0], [0], [1], [0, 0, 1, 1], [], []>} : vector<64x57xf32>, vector<57x128xf32>, vector<64x128xf32> -> vector<64x128xf32>
    %68 = arith.addf %64, %67 : vector<64x128xf32>
    %c2_39 = arith.constant 2 : index
    %c0_40 = arith.constant 0 : index
    %c0_41 = arith.constant 0 : index
    %69 = vector.load %arg2[%c2_39, %c0_40, %c0_41] : memref<3x64x57xf32, #tpu.memory_space<vmem>>, vector<1x64x57xf32>
    %70 = vector.shape_cast %69 : vector<1x64x57xf32> to vector<64x57xf32>
    %cst_42 = arith.constant dense<0.000000e+00> : vector<64x128xf32>
    %71 = tpu.matmul %70, %61, %cst_42 {dimension_numbers = #tpu.dot_dimension_numbers<[1], [0], [0], [1], [0, 0, 1, 1], [], []>} : vector<64x57xf32>, vector<57x128xf32>, vector<64x128xf32> -> vector<64x128xf32>
    %72 = arith.addf %68, %71 : vector<64x128xf32>
    %c0_43 = arith.constant 0 : index
    %c0_44 = arith.constant 0 : index
    %73 = vector.load %arg3[%c0_43, %c0_44] : memref<64x1xf32, #tpu.memory_space<vmem>>, vector<64x1xf32>
    %74 = vector.broadcast %73 : vector<64x1xf32> to vector<64x128xf32>
    %75 = arith.addf %72, %74 : vector<64x128xf32>
    %cst_45 = arith.constant 0.000000e+00 : f32
    %76 = vector.broadcast %cst_45 : f32 to vector<64x128xf32>
    %77 = arith.subf %76, %75 : vector<64x128xf32>
    %78 = math.exp %77 : vector<64x128xf32>
    %cst_46 = arith.constant 1.000000e+00 : f32
    %79 = vector.broadcast %cst_46 : f32 to vector<64x128xf32>
    %80 = arith.addf %79, %78 : vector<64x128xf32>
    %81 = tpu.reciprocal %80 : vector<64x128xf32> -> vector<64x128xf32>
    %82 = arith.mulf %75, %81 : vector<64x128xf32>
    %cst_47 = arith.constant dense<0.000000e+00> : vector<64xf32>
    %83 = vector.multi_reduction <add>, %82, %cst_47 [1] : vector<64x128xf32> to vector<64xf32>
    %84 = vector.shape_cast %83 : vector<64xf32> to vector<64x1xf32>
    %85 = arith.addf %45, %84 : vector<64x1xf32>
    %86 = arith.mulf %82, %82 : vector<64x128xf32>
    %cst_48 = arith.constant dense<0.000000e+00> : vector<64xf32>
    %87 = vector.multi_reduction <add>, %86, %cst_48 [1] : vector<64x128xf32> to vector<64xf32>
    %88 = vector.shape_cast %87 : vector<64xf32> to vector<64x1xf32>
    %89 = arith.addf %49, %88 : vector<64x1xf32>
    %c0_49 = arith.constant 0 : index
    %c0_50 = arith.constant 0 : index
    %90 = vector.load %arg4[%c0_49, %c0_50] : memref<64x1xf32, #tpu.memory_space<vmem>>, vector<64x1xf32>
    %91 = arith.addf %90, %85 : vector<64x1xf32>
    %c0_51 = arith.constant 0 : index
    %c0_52 = arith.constant 0 : index
    %92 = vector.load %arg4[%c0_51, %c0_52] : memref<64x1xf32, #tpu.memory_space<vmem>>, vector<64x1xf32>
    tpu.vector_store %arg4[%c0_51, %c0_52], %91 {strides = array<i32>} : memref<64x1xf32, #tpu.memory_space<vmem>>, vector<64x1xf32>,
    %c0_53 = arith.constant 0 : index
    %c0_54 = arith.constant 0 : index
    %93 = vector.load %arg5[%c0_53, %c0_54] : memref<64x1xf32, #tpu.memory_space<vmem>>, vector<64x1xf32>
    %94 = arith.addf %93, %89 : vector<64x1xf32>
    %c0_55 = arith.constant 0 : index
    %c0_56 = arith.constant 0 : index
    %95 = vector.load %arg5[%c0_55, %c0_56] : memref<64x1xf32, #tpu.memory_space<vmem>>, vector<64x1xf32>
    tpu.vector_store %arg5[%c0_55, %c0_56], %94 {strides = array<i32>} : memref<64x1xf32, #tpu.memory_space<vmem>>, vector<64x1xf32>,
    return
  }
  func.func @transform_0(%arg0: i32) -> (i32, i32, i32) {
    %c0_i32 = arith.constant 0 : i32
    %c0_i32_0 = arith.constant 0 : i32
    %c0_i32_1 = arith.constant 0 : i32
    return %arg0, %c0_i32, %c0_i32_0 : i32, i32, i32
  }
  func.func @transform_1(%arg0: i32) -> (i32, i32, i32) {
    %c0_i32 = arith.constant 0 : i32
    %c0_i32_0 = arith.constant 0 : i32
    %c0_i32_1 = arith.constant 0 : i32
    %c0_i32_2 = arith.constant 0 : i32
    return %c0_i32, %c0_i32_0, %c0_i32_1 : i32, i32, i32
  }
  func.func @transform_2(%arg0: i32) -> (i32, i32) {
    %c0_i32 = arith.constant 0 : i32
    %c0_i32_0 = arith.constant 0 : i32
    %c0_i32_1 = arith.constant 0 : i32
    return %c0_i32, %c0_i32_0 : i32, i32
  }
  func.func @transform_3(%arg0: i32) -> (i32, i32) {
    %c0_i32 = arith.constant 0 : i32
    %c0_i32_0 = arith.constant 0 : i32
    %c0_i32_1 = arith.constant 0 : i32
    return %c0_i32, %c0_i32_0 : i32, i32
  }
  func.func @transform_4(%arg0: i32) -> (i32, i32) {
    %c0_i32 = arith.constant 0 : i32
    %c0_i32_0 = arith.constant 0 : i32
    %c0_i32_1 = arith.constant 0 : i32
    return %c0_i32, %c0_i32_0 : i32, i32
  }
}

</mosaic_0001>

<llo_original>
// kernel: tpu_custom_call.1
$region0: #{tpu_custom_call.1}
  #allocation0 [shape = 'u32[]', space=smem, size = 0x4, offset = 0x4, fixed_abs, tag = 'smem constant byte address 0x4 - core index']
  #allocation1 [shape = 'u32[144,128]{1,0:T(1,128)}', space=vmem, size = 0x12000, scoped, tag = 'internal scratch']
  %s0 = inlined_call_operand.vmem [shape: f32[4,57,128], index: 0, kind: input, shape index: {}]
  %s1 = inlined_call_operand.vmem [shape: f32[3,64,57], index: 1, kind: input, shape index: {}]
  %s2 = inlined_call_operand.vmem [shape: f32[64,1], index: 2, kind: input, shape index: {}]
  %s3 = inlined_call_operand.vmem [shape: f32[64,1], index: 3, kind: output, shape index: {0}]
  %s4 = inlined_call_operand.vmem [shape: f32[64,1], index: 4, kind: output, shape index: {1}]
  %5 = xla_tuple %s3, %s4
  %s6 = sld [smem:[#allocation0]]
  $region57: #{tpu_custom_call.1} parent=0
    _
  %s8 = ssub.s32 1, %s6
  %s9 = scalar_select 0, %s8, %s6
  loop: start=0, step=1, limit=4
  $region2: #{tpu_custom_call.1} parent=0 // loop_pre_header
    _
  $region3: #{tpu_custom_call.1} parent=0 // loop_header
    %s11 = sphi 0, %s15
    %p12 = scmp.ge.s32.totalorder %s11, 4
    %s21 = sphi 0, %s23
    %s24 = sphi 0, %s21
    %s25 = sphi 0, %s24
    %s41 = sphi 0, %s25
    %s45 = sphi 0, %s45
    %s47 = sphi 0, %s45
    %s48 = sphi 0, %s47
    %s62 = sphi 0, %s48
    %s66 = sphi 0, %s66
    %s68 = sphi 0, %s66
    %s69 = sphi 0, %s68
    %s83 = sphi 0, %s69
    %s87 = sphi 0, %s87
    %s89 = sphi 0, %s87
    %s90 = sphi 0, %s89
    %s104 = sphi 0, %s90
    %s108 = sphi 0, %s108
    %s110 = sphi 0, %s108
    %s111 = sphi 0, %s110
    %s125 = sphi 0, %s111
  $region4: #{tpu_custom_call.1} parent=0 // loop_header_branch
    %14 = sbr.rel (%p12) target = $region8
  $region5: #{tpu_custom_call.1} parent=0 // loop_body
    %s16 = ssub.s32 %s11, 1
    %s17 = ssub.s32 %s11, 2
    %s18 = sadd.s32 %s11, 1
    %s19 = ssub.s32 %s11, %s18
    %p20 = scmp.eq.s32.totalorder %s19, 0
    %s22 = sadd.s32 %s21, 1
    %s23 = scalar_select %p20, %s21, %s22
    %p26 = pneg %p20
    %p27 = scmp.eq.s32.totalorder %s11, 1
    %p28 = por %p26, %p27
    %p29 = scmp.ne.s32.totalorder %s21, %s24
    %p30 = scmp.eq.s32.totalorder %s11, 0
    %p31 = por %p29, %p30
    %p32 = scmp.ne.s32.totalorder %s21, %s24
    %p33 = scmp.eq.s32.totalorder %s16, 1
    %p34 = por %p32, %p33
    %p35 = scmp.ne.s32.totalorder %s24, %s25
    %p36 = scmp.eq.s32.totalorder %s16, 0
    %p37 = por %p35, %p36
    %p38 = scmp.ne.s32.totalorder %s24, %s25
    %p39 = scmp.eq.s32.totalorder %s17, 1
    %p40 = por %p38, %p39
    %p42 = scmp.ne.s32.totalorder %s25, %s41
    %p43 = scmp.eq.s32.totalorder %s17, 0
    %p44 = por %p42, %p43
    %s46 = sadd.s32 %s45, 1
    %p49 = scmp.eq.s32.totalorder %s11, 1
    %p50 = scmp.ne.s32.totalorder %s45, %s47
    %p51 = scmp.eq.s32.totalorder %s11, 0
    %p52 = por %p50, %p51
    %p53 = scmp.ne.s32.totalorder %s45, %s47
    %p54 = scmp.eq.s32.totalorder %s16, 1
    %p55 = por %p53, %p54
    %p56 = scmp.ne.s32.totalorder %s47, %s48
    %p57 = scmp.eq.s32.totalorder %s16, 0
    %p58 = por %p56, %p57
    %p59 = scmp.ne.s32.totalorder %s47, %s48
    %p60 = scmp.eq.s32.totalorder %s17, 1
    %p61 = por %p59, %p60
    %p63 = scmp.ne.s32.totalorder %s48, %s62
    %p64 = scmp.eq.s32.totalorder %s17, 0
    %p65 = por %p63, %p64
    %s67 = sadd.s32 %s66, 1
    %p70 = scmp.eq.s32.totalorder %s11, 1
    %p71 = scmp.ne.s32.totalorder %s66, %s68
    %p72 = scmp.eq.s32.totalorder %s11, 0
    %p73 = por %p71, %p72
    %p74 = scmp.ne.s32.totalorder %s66, %s68
    %p75 = scmp.eq.s32.totalorder %s16, 1
    %p76 = por %p74, %p75
    %p77 = scmp.ne.s32.totalorder %s68, %s69
    %p78 = scmp.eq.s32.totalorder %s16, 0
    %p79 = por %p77, %p78
    %p80 = scmp.ne.s32.totalorder %s68, %s69
    %p81 = scmp.eq.s32.totalorder %s17, 1
    %p82 = por %p80, %p81
    %p84 = scmp.ne.s32.totalorder %s69, %s83
    %p85 = scmp.eq.s32.totalorder %s17, 0
    %p86 = por %p84, %p85
    %s88 = sadd.s32 %s87, 1
    %p91 = scmp.eq.s32.totalorder %s11, 1
    %p92 = scmp.ne.s32.totalorder %s87, %s89
    %p93 = scmp.eq.s32.totalorder %s11, 0
    %p94 = por %p92, %p93
    %p95 = scmp.ne.s32.totalorder %s87, %s89
    %p96 = scmp.eq.s32.totalorder %s16, 1
    %p97 = por %p95, %p96
    %p98 = scmp.ne.s32.totalorder %s89, %s90
    %p99 = scmp.eq.s32.totalorder %s16, 0
    %p100 = por %p98, %p99
    %p101 = scmp.ne.s32.totalorder %s89, %s90
    %p102 = scmp.eq.s32.totalorder %s17, 1
    %p103 = por %p101, %p102
    %p105 = scmp.ne.s32.totalorder %s90, %s104
    %p106 = scmp.eq.s32.totalorder %s17, 0
    %p107 = por %p105, %p106
    %s109 = sadd.s32 %s108, 1
    %p112 = scmp.eq.s32.totalorder %s11, 1
    %p113 = scmp.ne.s32.totalorder %s108, %s110
    %p114 = scmp.eq.s32.totalorder %s11, 0
    %p115 = por %p113, %p114
    %p116 = scmp.ne.s32.totalorder %s108, %s110
    %p117 = scmp.eq.s32.totalorder %s16, 1
    %p118 = por %p116, %p117
    %p119 = scmp.ne.s32.totalorder %s110, %s111
    %p120 = scmp.eq.s32.totalorder %s16, 0
    %p121 = por %p119, %p120
    %p122 = scmp.ne.s32.totalorder %s110, %s111
    %p123 = scmp.eq.s32.totalorder %s17, 1
    %p124 = por %p122, %p123
    %p126 = scmp.ne.s32.totalorder %s111, %s125
    %p127 = scmp.eq.s32.totalorder %s17, 0
    %p128 = por %p126, %p127
    %p129 = scmp.le.s32.totalorder 1, %s11
    %p130 = scmp.lt.s32.totalorder %s11, 3
    %p131 = pnand %p129, %p130
    %p132 = pneg %p131
    // Predicated region
    $region9: #{tpu_custom_call.1} parent=5 // pred_check
      _
    $region10: #{tpu_custom_call.1} parent=5 // pred_check_branch
      %134 = sbr.rel (%p131) target = $region12
    $region11: #{tpu_custom_call.1} parent=5 // pred_region
      %s135 = ssub.s32 %s11, 1
      // Predicated region
      $region13: #{tpu_custom_call.1} parent=11 // pred_check
        %p136 = pneg %p58
      $region14: #{tpu_custom_call.1} parent=11 // pred_check_branch
        %138 = sbr.rel (%p136) target = $region16
      $region15: #{tpu_custom_call.1} parent=11 // pred_region
        _
      $region16: #{tpu_custom_call.1} parent=11 // pred_fallthru
        _
      // Predicated region
      $region17: #{tpu_custom_call.1} parent=11 // pred_check
        %p139 = pneg %p79
      $region18: #{tpu_custom_call.1} parent=11 // pred_check_branch
        %141 = sbr.rel (%p139) target = $region20
      $region19: #{tpu_custom_call.1} parent=11 // pred_region
        _
      $region20: #{tpu_custom_call.1} parent=11 // pred_fallthru
        _
    $region12: #{tpu_custom_call.1} parent=5 // pred_fallthru
      _
    %p142 = scmp.lt.s32.totalorder %s11, 2
    // Predicated region
    $region21: #{tpu_custom_call.1} parent=5 // pred_check
      %p143 = pneg %p142
    $region22: #{tpu_custom_call.1} parent=5 // pred_check_branch
      %145 = sbr.rel (%p143) target = $region24
    $region23: #{tpu_custom_call.1} parent=5 // pred_region
      // Predicated region
      $region25: #{tpu_custom_call.1} parent=23 // pred_check
        %p146 = pneg %p31
      $region26: #{tpu_custom_call.1} parent=23 // pred_check_branch
        %148 = sbr.rel (%p146) target = $region28
      $region27: #{tpu_custom_call.1} parent=23 // pred_region
        %s149 = smul.u32 2, %s11
        %p150 = scmp.lt.s32.totalorder %s149, 3
        %s151 = scalar_select %p150, %s149, 3
        %s152 = smul.addr %s151, 8
        %s153 = smul.addr %s152, 8
        %s154 = scalar_lea.vmem %s0, %s153
        %s155 = smul.u32 2, %s11
      $region28: #{tpu_custom_call.1} parent=23 // pred_fallthru
        _
    $region24: #{tpu_custom_call.1} parent=5 // pred_fallthru
      _
    %p156 = scmp.le.s32.totalorder 1, %s11
    %p157 = scmp.lt.s32.totalorder %s11, 3
    %p158 = pnand %p156, %p157
    %p159 = pneg %p158
    // Predicated region
    $region29: #{tpu_custom_call.1} parent=5 // pred_check
      _
    $region30: #{tpu_custom_call.1} parent=5 // pred_check_branch
      %161 = sbr.rel (%p158) target = $region32
    $region31: #{tpu_custom_call.1} parent=5 // pred_region
      %s162 = ssub.s32 %s11, 1
      %s163 = smul.u32 2, %s16
      %p164 = scmp.lt.s32.totalorder %s163, 3
      %s165 = scalar_select %p164, %s163, 3
      %s166 = smul.addr %s165, 8
      %s167 = smul.addr %s166, 8
      %s168 = scalar_lea.vmem %s0, %s167
      %p169 = pneg %p37
      %p170 = pneg %p34
      %p171 = pneg %p58
      %p172 = pneg %p55
      %p173 = pneg %p79
      %p174 = pneg %p76
      %p175 = pneg %p100
      %p176 = pneg %p97
      %p177 = pneg %p121
      %p178 = pneg %p118
      %s179 = smul.u32 2, %s16
      %p180 = scmp.lt.s32.totalorder %s179, 3
      %s181 = scalar_select %p180, %s179, 3
      %s182 = smul.addr %s181, 8
      %s183 = smul.addr %s182, 8
      %s184 = scalar_lea.vmem %s0, %s183
      %s185 = smul.u32 2, %s16
      %p186 = scmp.eq.s32.totalorder %s16, 0
      // Predicated region
      $region33: #{tpu_custom_call.1} parent=31 // pred_check
        %p187 = pneg %p186
      $region34: #{tpu_custom_call.1} parent=31 // pred_check_branch
        %189 = sbr.rel (%p187) target = $region36
      $region35: #{tpu_custom_call.1} parent=31 // pred_region
        %vm190 = vcmask 7168
        %191 = vst.msk [vmem:[%s3] sm:$0xff] %vm190, 0.0
        %192 = vst.msk [vmem:[%s3 + $0x8] sm:$0xff] %vm190, 0.0
        %193 = vst.msk [vmem:[%s3 + $0x10] sm:$0xff] %vm190, 0.0
        %194 = vst.msk [vmem:[%s3 + $0x18] sm:$0xff] %vm190, 0.0
        %195 = vst.msk [vmem:[%s3 + $0x20] sm:$0xff] %vm190, 0.0
        %196 = vst.msk [vmem:[%s3 + $0x28] sm:$0xff] %vm190, 0.0
        %197 = vst.msk [vmem:[%s3 + $0x30] sm:$0xff] %vm190, 0.0
        %198 = vst.msk [vmem:[%s3 + $0x38] sm:$0xff] %vm190, 0.0
        %199 = vst.msk [vmem:[%s4] sm:$0xff] %vm190, 0.0
        %200 = vst.msk [vmem:[%s4 + $0x8] sm:$0xff] %vm190, 0.0
        %201 = vst.msk [vmem:[%s4 + $0x10] sm:$0xff] %vm190, 0.0
        %202 = vst.msk [vmem:[%s4 + $0x18] sm:$0xff] %vm190, 0.0
        %203 = vst.msk [vmem:[%s4 + $0x20] sm:$0xff] %vm190, 0.0
        %204 = vst.msk [vmem:[%s4 + $0x28] sm:$0xff] %vm190, 0.0
        %205 = vst.msk [vmem:[%s4 + $0x30] sm:$0xff] %vm190, 0.0
        %206 = vst.msk [vmem:[%s4 + $0x38] sm:$0xff] %vm190, 0.0
      $region36: #{tpu_custom_call.1} parent=31 // pred_fallthru
        _
      %v207 = vlaneseq
      %v208 = vand.u32 %v207, 127
      %vm209 = vcmp.eq.s32.totalorder %v208, 0
      %vm210 = vcmp.eq.s32.totalorder %v208, 127
      %v211 = vld [vmem:[%s184] sm:$0xff]
      %v212 = vld [vmem:[%s184 + $0x8] sm:$0xff]
      %v213 = vld [vmem:[%s184 + $0x10] sm:$0xff]
      %v214 = vld [vmem:[%s184 + $0x18] sm:$0xff]
      %v215 = vld [vmem:[%s184 + $0x20] sm:$0xff]
      %v216 = vld [vmem:[%s184 + $0x28] sm:$0xff]
      %v217 = vld [vmem:[%s184 + $0x30] sm:$0xff]
      %v218 = vld [vmem:[%s184 + $0x38] sm:$0x1]
      %219 = vrot.lane.b32.xlu0 %v211, 1
      %v220 = vpop.permute.xlu0 %219
      %221 = vrot.lane.b32.xlu0 %v212, 1
      %v222 = vpop.permute.xlu0 %221
      %223 = vrot.lane.b32.xlu0 %v213, 1
      %v224 = vpop.permute.xlu0 %223
      %225 = vrot.lane.b32.xlu0 %v214, 1
      %v226 = vpop.permute.xlu0 %225
      %227 = vrot.lane.b32.xlu0 %v215, 1
      %v228 = vpop.permute.xlu0 %227
      %229 = vrot.lane.b32.xlu0 %v216, 1
      %v230 = vpop.permute.xlu0 %229
      %231 = vrot.lane.b32.xlu0 %v217, 1
      %v232 = vpop.permute.xlu0 %231
      %233 = vrot.lane.b32.xlu0 %v218, 1
      %v234 = vpop.permute.xlu0 %233
      %v235 = vsel %vm209, 1, 0
      %vm236 = vcmp.eq.s32.totalorder %v235, 1
      %v237 = vsel %vm236, 0.0, %v220
      %v238 = vsel %vm236, 0.0, %v222
      %v239 = vsel %vm236, 0.0, %v224
      %v240 = vsel %vm236, 0.0, %v226
      %v241 = vsel %vm236, 0.0, %v228
      %v242 = vsel %vm236, 0.0, %v230
      %v243 = vsel %vm236, 0.0, %v232
      %v244 = vsel %vm236, 0.0, %v234
      %245 = vrot.lane.b32.xlu0 %v211, 127
      %v246 = vpop.permute.xlu0 %245
      %247 = vrot.lane.b32.xlu0 %v212, 127
      %v248 = vpop.permute.xlu0 %247
      %249 = vrot.lane.b32.xlu0 %v213, 127
      %v250 = vpop.permute.xlu0 %249
      %251 = vrot.lane.b32.xlu0 %v214, 127
      %v252 = vpop.permute.xlu0 %251
      %253 = vrot.lane.b32.xlu0 %v215, 127
      %v254 = vpop.permute.xlu0 %253
      %255 = vrot.lane.b32.xlu0 %v216, 127
      %v256 = vpop.permute.xlu0 %255
      %257 = vrot.lane.b32.xlu0 %v217, 127
      %v258 = vpop.permute.xlu0 %257
      %259 = vrot.lane.b32.xlu0 %v218, 127
      %v260 = vpop.permute.xlu0 %259
      %v261 = vsel %vm210, 1, 0
      %vm262 = vcmp.eq.s32.totalorder %v261, 1
      %v263 = vsel %vm262, 0.0, %v246
      %v264 = vsel %vm262, 0.0, %v248
      %v265 = vsel %vm262, 0.0, %v250
      %v266 = vsel %vm262, 0.0, %v252
      %v267 = vsel %vm262, 0.0, %v254
      %v268 = vsel %vm262, 0.0, %v256
      %v269 = vsel %vm262, 0.0, %v258
      %v270 = vsel %vm262, 0.0, %v260
      %v271 = vld [vmem:[%s1] sm:$0xff]
      %v272 = vld [vmem:[%s1 + $0x8] sm:$0xff]
      %v273 = vld [vmem:[%s1 + $0x10] sm:$0xff]
      %v274 = vld [vmem:[%s1 + $0x18] sm:$0xff]
      %v275 = vld [vmem:[%s1 + $0x20] sm:$0xff]
      %v276 = vld [vmem:[%s1 + $0x28] sm:$0xff]
      %v277 = vld [vmem:[%s1 + $0x30] sm:$0xff]
      %v278 = vld [vmem:[%s1 + $0x38] sm:$0xff]
      %s279 = scalar_lea.vmem %s1, 64
      %v280 = vld [vmem:[%s279] sm:$0xff]
      %v281 = vld [vmem:[%s279 + $0x8] sm:$0xff]
      %v282 = vld [vmem:[%s279 + $0x10] sm:$0xff]
      %v283 = vld [vmem:[%s279 + $0x18] sm:$0xff]
      %v284 = vld [vmem:[%s279 + $0x20] sm:$0xff]
      %v285 = vld [vmem:[%s279 + $0x28] sm:$0xff]
      %v286 = vld [vmem:[%s279 + $0x30] sm:$0xff]
      %v287 = vld [vmem:[%s279 + $0x38] sm:$0xff]
      %vm288 = vcmask 465920
      %v290 = vsel %vm288, %v280, 0
      %v293 = vsel %vm288, %v281, 0
      %v296 = vsel %vm288, %v282, 0
      %v299 = vsel %vm288, %v283, 0
      %v302 = vsel %vm288, %v284, 0
      %v305 = vsel %vm288, %v285, 0
      %v308 = vsel %vm288, %v286, 0
      %v311 = vsel %vm288, %v287, 0
      %vm313 = vcmask 1040384
      %v315 = vsel %vm313, %v218, 0
      %317 = vmatprep.subr.mxu0 0.0
      %318 = vmatpush1.msra.mxu0 %v211
      %319 = vmatprep.subr.mxu0 0.0
      %320 = vmatpush1.msra.mxu0 %v212
      %321 = vmatprep.subr.mxu0 0.0
      %322 = vmatpush1.msra.mxu0 %v213
      %323 = vmatprep.subr.mxu0 0.0
      %324 = vmatpush1.msra.mxu0 %v214
      %325 = vmatprep.subr.mxu0 0.0
      %326 = vmatpush1.msra.mxu0 %v215
      %327 = vmatprep.subr.mxu0 0.0
      %328 = vmatpush1.msra.mxu0 %v216
      %329 = vmatprep.subr.mxu0 0.0
      %330 = vmatpush1.msra.mxu0 %v217
      %331 = vmatprep.subr.mxu0 0.0
      %332 = vmatpush1.msra.mxu0 %v315
      %333 = vmatprep.subr.mxu0 0.0
      %334 = vmatpush1.msra.mxu0 0.0
      %335 = vmatprep.subr.mxu0 0.0
      %336 = vmatpush1.msra.mxu0 0.0
      %337 = vmatprep.subr.mxu0 0.0
      %338 = vmatpush1.msra.mxu0 0.0
      %339 = vmatprep.subr.mxu0 0.0
      %340 = vmatpush1.msra.mxu0 0.0
      %341 = vmatprep.subr.mxu0 0.0
      %342 = vmatpush1.msra.mxu0 0.0
      %343 = vmatprep.subr.mxu0 0.0
      %344 = vmatpush1.msra.mxu0 0.0
      %345 = vmatprep.subr.mxu0 0.0
      %346 = vmatpush1.msra.mxu0 0.0
      %347 = vmatprep.subr.mxu0 0.0
      %348 = vmatpush1.msra.mxu0 0.0
      %349 = vmatprep.subr.mxu0 0.0
      %350 = vmatpush1.msra.mxu0 0.0
      %351 = vmatprep.subr.mxu0 0.0
      %352 = vmatpush1.msra.mxu0 0.0
      %353 = vmatprep.subr.mxu0 0.0
      %354 = vmatpush1.msra.mxu0 0.0
      %355 = vmatprep.subr.mxu0 0.0
      %356 = vmatpush1.msra.mxu0 0.0
      %357 = vmatprep.subr.mxu0 0.0
      %358 = vmatpush1.msra.mxu0 0.0
      %359 = vmatprep.subr.mxu0 0.0
      %360 = vmatpush1.msra.mxu0 0.0
      %361 = vmatprep.subr.mxu0 0.0
      %362 = vmatpush1.msra.mxu0 0.0
      %363 = vmatprep.subr.mxu0 0.0
      %364 = vmatpush1.msra.mxu0 0.0
      %365 = vmatprep.subr.mxu0 0.0
      %366 = vmatpush1.msra.mxu0 0.0
      %367 = vmatprep.subr.mxu0 0.0
      %368 = vmatpush1.msra.mxu0 0.0
      %369 = vmatprep.subr.mxu0 0.0
      %370 = vmatpush1.msra.mxu0 0.0
      %371 = vmatprep.subr.mxu0 0.0
      %372 = vmatpush1.msra.mxu0 0.0
      %373 = vmatprep.subr.mxu0 0.0
      %374 = vmatpush1.msra.mxu0 0.0
      %375 = vmatprep.subr.mxu0 0.0
      %376 = vmatpush1.msra.mxu0 0.0
      %377 = vmatprep.subr.mxu0 0.0
      %378 = vmatpush1.msra.mxu0 0.0
      %379 = vmatprep.subr.mxu0 0.0
      %380 = vmatpush1.msra.mxu0 0.0
      %381 = vmatprep.mubr.f32.mxu0 0.0
      %382 = vmatmul.mubr.f32.gmra.mrb[0].mxu0 %v290
      %v383 = vpop.f32.mrb[0].mxu0
      %v384 = vadd.f32 0.0, %v383
      %v385 = vpop.f32.mrb[0].mxu0
      %386 = vmatprep.mubr.f32.mxu0 0.0
      %387 = vmatmul.mubr.f32.gmra.mrb[0].mxu0 %v293
      %v388 = vpop.f32.mrb[0].mxu0
      %v389 = vadd.f32 0.0, %v388
      %v390 = vpop.f32.mrb[0].mxu0
      %391 = vmatprep.mubr.f32.mxu0 0.0
      %392 = vmatmul.mubr.f32.gmra.mrb[0].mxu0 %v296
      %v393 = vpop.f32.mrb[0].mxu0
      %v394 = vadd.f32 0.0, %v393
      %v395 = vpop.f32.mrb[0].mxu0
      %396 = vmatprep.mubr.f32.mxu0 0.0
      %397 = vmatmul.mubr.f32.gmra.mrb[0].mxu0 %v299
      %v398 = vpop.f32.mrb[0].mxu0
      %v399 = vadd.f32 0.0, %v398
      %v400 = vpop.f32.mrb[0].mxu0
      %401 = vmatprep.mubr.f32.mxu0 0.0
      %402 = vmatmul.mubr.f32.gmra.mrb[0].mxu0 %v302
      %v403 = vpop.f32.mrb[0].mxu0
      %v404 = vadd.f32 0.0, %v403
      %v405 = vpop.f32.mrb[0].mxu0
      %406 = vmatprep.mubr.f32.mxu0 0.0
      %407 = vmatmul.mubr.f32.gmra.mrb[0].mxu0 %v305
      %v408 = vpop.f32.mrb[0].mxu0
      %v409 = vadd.f32 0.0, %v408
      %v410 = vpop.f32.mrb[0].mxu0
      %411 = vmatprep.mubr.f32.mxu0 0.0
      %412 = vmatmul.mubr.f32.gmra.mrb[0].mxu0 %v308
      %v413 = vpop.f32.mrb[0].mxu0
      %v414 = vadd.f32 0.0, %v413
      %v415 = vpop.f32.mrb[0].mxu0
      %416 = vmatprep.mubr.f32.mxu0 0.0
      %417 = vmatmul.mubr.f32.gmra.mrb[0].mxu0 %v311
      %v418 = vpop.f32.mrb[0].mxu0
      %v419 = vadd.f32 0.0, %v418
      %v420 = vpop.f32.mrb[0].mxu0
      %421 = vdwg.mxu0
      %v423 = vsel %vm288, %v271, 0
      %v426 = vsel %vm288, %v272, 0
      %v429 = vsel %vm288, %v273, 0
      %v432 = vsel %vm288, %v274, 0
      %v435 = vsel %vm288, %v275, 0
      %v438 = vsel %vm288, %v276, 0
      %v441 = vsel %vm288, %v277, 0
      %v444 = vsel %vm288, %v278, 0
      %v447 = vsel %vm313, %v244, 0
      %449 = vmatprep.subr.mxu0 0.0
      %450 = vmatpush1.msra.mxu0 %v237
      %451 = vmatprep.subr.mxu0 0.0
      %452 = vmatpush1.msra.mxu0 %v238
      %453 = vmatprep.subr.mxu0 0.0
      %454 = vmatpush1.msra.mxu0 %v239
      %455 = vmatprep.subr.mxu0 0.0
      %456 = vmatpush1.msra.mxu0 %v240
      %457 = vmatprep.subr.mxu0 0.0
      %458 = vmatpush1.msra.mxu0 %v241
      %459 = vmatprep.subr.mxu0 0.0
      %460 = vmatpush1.msra.mxu0 %v242
      %461 = vmatprep.subr.mxu0 0.0
      %462 = vmatpush1.msra.mxu0 %v243
      %463 = vmatprep.subr.mxu0 0.0
      %464 = vmatpush1.msra.mxu0 %v447
      %465 = vmatprep.subr.mxu0 0.0
      %466 = vmatpush1.msra.mxu0 0.0
      %467 = vmatprep.subr.mxu0 0.0
      %468 = vmatpush1.msra.mxu0 0.0
      %469 = vmatprep.subr.mxu0 0.0
      %470 = vmatpush1.msra.mxu0 0.0
      %471 = vmatprep.subr.mxu0 0.0
      %472 = vmatpush1.msra.mxu0 0.0
      %473 = vmatprep.subr.mxu0 0.0
      %474 = vmatpush1.msra.mxu0 0.0
      %475 = vmatprep.subr.mxu0 0.0
      %476 = vmatpush1.msra.mxu0 0.0
      %477 = vmatprep.subr.mxu0 0.0
      %478 = vmatpush1.msra.mxu0 0.0
      %479 = vmatprep.subr.mxu0 0.0
      %480 = vmatpush1.msra.mxu0 0.0
      %481 = vmatprep.subr.mxu0 0.0
      %482 = vmatpush1.msra.mxu0 0.0
      %483 = vmatprep.subr.mxu0 0.0
      %484 = vmatpush1.msra.mxu0 0.0
      %485 = vmatprep.subr.mxu0 0.0
      %486 = vmatpush1.msra.mxu0 0.0
      %487 = vmatprep.subr.mxu0 0.0
      %488 = vmatpush1.msra.mxu0 0.0
      %489 = vmatprep.subr.mxu0 0.0
      %490 = vmatpush1.msra.mxu0 0.0
      %491 = vmatprep.subr.mxu0 0.0
      %492 = vmatpush1.msra.mxu0 0.0
      %493 = vmatprep.subr.mxu0 0.0
      %494 = vmatpush1.msra.mxu0 0.0
      %495 = vmatprep.subr.mxu0 0.0
      %496 = vmatpush1.msra.mxu0 0.0
      %497 = vmatprep.subr.mxu0 0.0
      %498 = vmatpush1.msra.mxu0 0.0
      %499 = vmatprep.subr.mxu0 0.0
      %500 = vmatpush1.msra.mxu0 0.0
      %501 = vmatprep.subr.mxu0 0.0
      %502 = vmatpush1.msra.mxu0 0.0
      %503 = vmatprep.subr.mxu0 0.0
      %504 = vmatpush1.msra.mxu0 0.0
      %505 = vmatprep.subr.mxu0 0.0
      %506 = vmatpush1.msra.mxu0 0.0
      %507 = vmatprep.subr.mxu0 0.0
      %508 = vmatpush1.msra.mxu0 0.0
      %509 = vmatprep.subr.mxu0 0.0
      %510 = vmatpush1.msra.mxu0 0.0
      %511 = vmatprep.subr.mxu0 0.0
      %512 = vmatpush1.msra.mxu0 0.0
      %513 = vmatprep.mubr.f32.mxu0 0.0
      %514 = vmatmul.mubr.f32.gmra.mrb[0].mxu0 %v423
      %v515 = vpop.f32.mrb[0].mxu0
      %v516 = vadd.f32 %v384, %v515
      %v517 = vpop.f32.mrb[0].mxu0
      %518 = vmatprep.mubr.f32.mxu0 0.0
      %519 = vmatmul.mubr.f32.gmra.mrb[0].mxu0 %v426
      %v520 = vpop.f32.mrb[0].mxu0
      %v521 = vadd.f32 %v389, %v520
      %v522 = vpop.f32.mrb[0].mxu0
      %523 = vmatprep.mubr.f32.mxu0 0.0
      %524 = vmatmul.mubr.f32.gmra.mrb[0].mxu0 %v429
      %v525 = vpop.f32.mrb[0].mxu0
      %v526 = vadd.f32 %v394, %v525
      %v527 = vpop.f32.mrb[0].mxu0
      %528 = vmatprep.mubr.f32.mxu0 0.0
      %529 = vmatmul.mubr.f32.gmra.mrb[0].mxu0 %v432
      %v530 = vpop.f32.mrb[0].mxu0
      %v531 = vadd.f32 %v399, %v530
      %v532 = vpop.f32.mrb[0].mxu0
      %533 = vmatprep.mubr.f32.mxu0 0.0
      %534 = vmatmul.mubr.f32.gmra.mrb[0].mxu0 %v435
      %v535 = vpop.f32.mrb[0].mxu0
      %v536 = vadd.f32 %v404, %v535
      %v537 = vpop.f32.mrb[0].mxu0
      %538 = vmatprep.mubr.f32.mxu0 0.0
      %539 = vmatmul.mubr.f32.gmra.mrb[0].mxu0 %v438
      %v540 = vpop.f32.mrb[0].mxu0
      %v541 = vadd.f32 %v409, %v540
      %v542 = vpop.f32.mrb[0].mxu0
      %543 = vmatprep.mubr.f32.mxu0 0.0
      %544 = vmatmul.mubr.f32.gmra.mrb[0].mxu0 %v441
      %v545 = vpop.f32.mrb[0].mxu0
      %v546 = vadd.f32 %v414, %v545
      %v547 = vpop.f32.mrb[0].mxu0
      %548 = vmatprep.mubr.f32.mxu0 0.0
      %549 = vmatmul.mubr.f32.gmra.mrb[0].mxu0 %v444
      %v550 = vpop.f32.mrb[0].mxu0
      %v551 = vadd.f32 %v419, %v550
      %v552 = vpop.f32.mrb[0].mxu0
      %553 = vdwg.mxu0
      %s554 = scalar_lea.vmem %s1, 128
      %v555 = vld [vmem:[%s554] sm:$0xff]
      %v556 = vld [vmem:[%s554 + $0x8] sm:$0xff]
      %v557 = vld [vmem:[%s554 + $0x10] sm:$0xff]
      %v558 = vld [vmem:[%s554 + $0x18] sm:$0xff]
      %v559 = vld [vmem:[%s554 + $0x20] sm:$0xff]
      %v560 = vld [vmem:[%s554 + $0x28] sm:$0xff]
      %v561 = vld [vmem:[%s554 + $0x30] sm:$0xff]
      %v562 = vld [vmem:[%s554 + $0x38] sm:$0xff]
      %v564 = vsel %vm288, %v555, 0
      %v567 = vsel %vm288, %v556, 0
      %v570 = vsel %vm288, %v557, 0
      %v573 = vsel %vm288, %v558, 0
      %v576 = vsel %vm288, %v559, 0
      %v579 = vsel %vm288, %v560, 0
      %v582 = vsel %vm288, %v561, 0
      %v585 = vsel %vm288, %v562, 0
      %v588 = vsel %vm313, %v270, 0
      %590 = vmatprep.subr.mxu0 0.0
      %591 = vmatpush1.msra.mxu0 %v263
      %592 = vmatprep.subr.mxu0 0.0
      %593 = vmatpush1.msra.mxu0 %v264
      %594 = vmatprep.subr.mxu0 0.0
      %595 = vmatpush1.msra.mxu0 %v265
      %596 = vmatprep.subr.mxu0 0.0
      %597 = vmatpush1.msra.mxu0 %v266
      %598 = vmatprep.subr.mxu0 0.0
      %599 = vmatpush1.msra.mxu0 %v267
      %600 = vmatprep.subr.mxu0 0.0
      %601 = vmatpush1.msra.mxu0 %v268
      %602 = vmatprep.subr.mxu0 0.0
      %603 = vmatpush1.msra.mxu0 %v269
      %604 = vmatprep.subr.mxu0 0.0
      %605 = vmatpush1.msra.mxu0 %v588
      %606 = vmatprep.subr.mxu0 0.0
      %607 = vmatpush1.msra.mxu0 0.0
      %608 = vmatprep.subr.mxu0 0.0
      %609 = vmatpush1.msra.mxu0 0.0
      %610 = vmatprep.subr.mxu0 0.0
      %611 = vmatpush1.msra.mxu0 0.0
      %612 = vmatprep.subr.mxu0 0.0
      %613 = vmatpush1.msra.mxu0 0.0
      %614 = vmatprep.subr.mxu0 0.0
      %615 = vmatpush1.msra.mxu0 0.0
      %616 = vmatprep.subr.mxu0 0.0
      %617 = vmatpush1.msra.mxu0 0.0
      %618 = vmatprep.subr.mxu0 0.0
      %619 = vmatpush1.msra.mxu0 0.0
      %620 = vmatprep.subr.mxu0 0.0
      %621 = vmatpush1.msra.mxu0 0.0
      %622 = vmatprep.subr.mxu0 0.0
      %623 = vmatpush1.msra.mxu0 0.0
      %624 = vmatprep.subr.mxu0 0.0
      %625 = vmatpush1.msra.mxu0 0.0
      %626 = vmatprep.subr.mxu0 0.0
      %627 = vmatpush1.msra.mxu0 0.0
      %628 = vmatprep.subr.mxu0 0.0
      %629 = vmatpush1.msra.mxu0 0.0
      %630 = vmatprep.subr.mxu0 0.0
      %631 = vmatpush1.msra.mxu0 0.0
      %632 = vmatprep.subr.mxu0 0.0
      %633 = vmatpush1.msra.mxu0 0.0
      %634 = vmatprep.subr.mxu0 0.0
      %635 = vmatpush1.msra.mxu0 0.0
      %636 = vmatprep.subr.mxu0 0.0
      %637 = vmatpush1.msra.mxu0 0.0
      %638 = vmatprep.subr.mxu0 0.0
      %639 = vmatpush1.msra.mxu0 0.0
      %640 = vmatprep.subr.mxu0 0.0
      %641 = vmatpush1.msra.mxu0 0.0
      %642 = vmatprep.subr.mxu0 0.0
      %643 = vmatpush1.msra.mxu0 0.0
      %644 = vmatprep.subr.mxu0 0.0
      %645 = vmatpush1.msra.mxu0 0.0
      %646 = vmatprep.subr.mxu0 0.0
      %647 = vmatpush1.msra.mxu0 0.0
      %648 = vmatprep.subr.mxu0 0.0
      %649 = vmatpush1.msra.mxu0 0.0
      %650 = vmatprep.subr.mxu0 0.0
      %651 = vmatpush1.msra.mxu0 0.0
      %652 = vmatprep.subr.mxu0 0.0
      %653 = vmatpush1.msra.mxu0 0.0
      %654 = vmatprep.mubr.f32.mxu0 0.0
      %655 = vmatmul.mubr.f32.gmra.mrb[0].mxu0 %v564
      %v656 = vpop.f32.mrb[0].mxu0
      %v657 = vadd.f32 0.0, %v656
      %v658 = vpop.f32.mrb[0].mxu0
      %659 = vmatprep.mubr.f32.mxu0 0.0
      %660 = vmatmul.mubr.f32.gmra.mrb[0].mxu0 %v567
      %v661 = vpop.f32.mrb[0].mxu0
      %v662 = vadd.f32 0.0, %v661
      %v663 = vpop.f32.mrb[0].mxu0
      %664 = vmatprep.mubr.f32.mxu0 0.0
      %665 = vmatmul.mubr.f32.gmra.mrb[0].mxu0 %v570
      %v666 = vpop.f32.mrb[0].mxu0
      %v667 = vadd.f32 0.0, %v666
      %v668 = vpop.f32.mrb[0].mxu0
      %669 = vmatprep.mubr.f32.mxu0 0.0
      %670 = vmatmul.mubr.f32.gmra.mrb[0].mxu0 %v573
      %v671 = vpop.f32.mrb[0].mxu0
      %v672 = vadd.f32 0.0, %v671
      %v673 = vpop.f32.mrb[0].mxu0
      %674 = vmatprep.mubr.f32.mxu0 0.0
      %675 = vmatmul.mubr.f32.gmra.mrb[0].mxu0 %v576
      %v676 = vpop.f32.mrb[0].mxu0
      %v677 = vadd.f32 0.0, %v676
      %v678 = vpop.f32.mrb[0].mxu0
      %679 = vmatprep.mubr.f32.mxu0 0.0
      %680 = vmatmul.mubr.f32.gmra.mrb[0].mxu0 %v579
      %v681 = vpop.f32.mrb[0].mxu0
      %v682 = vadd.f32 0.0, %v681
      %v683 = vpop.f32.mrb[0].mxu0
      %684 = vmatprep.mubr.f32.mxu0 0.0
      %685 = vmatmul.mubr.f32.gmra.mrb[0].mxu0 %v582
      %v686 = vpop.f32.mrb[0].mxu0
      %v687 = vadd.f32 0.0, %v686
      %v688 = vpop.f32.mrb[0].mxu0
      %689 = vmatprep.mubr.f32.mxu0 0.0
      %690 = vmatmul.mubr.f32.gmra.mrb[0].mxu0 %v585
      %v691 = vpop.f32.mrb[0].mxu0
      %v692 = vadd.f32 0.0, %v691
      %v693 = vpop.f32.mrb[0].mxu0
      %694 = vdwg.mxu0
      %v695 = vadd.f32 %v516, %v657
      %v696 = vadd.f32 %v521, %v662
      %v697 = vadd.f32 %v526, %v667
      %v698 = vadd.f32 %v531, %v672
      %v699 = vadd.f32 %v536, %v677
      %v700 = vadd.f32 %v541, %v682
      %v701 = vadd.f32 %v546, %v687
      %v702 = vadd.f32 %v551, %v692
      %v703 = vld [vmem:[%s2] sm:$0xff]
      %v704 = vld [vmem:[%s2 + $0x8] sm:$0xff]
      %v705 = vld [vmem:[%s2 + $0x10] sm:$0xff]
      %v706 = vld [vmem:[%s2 + $0x18] sm:$0xff]
      %v707 = vld [vmem:[%s2 + $0x20] sm:$0xff]
      %v708 = vld [vmem:[%s2 + $0x28] sm:$0xff]
      %v709 = vld [vmem:[%s2 + $0x30] sm:$0xff]
      %v710 = vld [vmem:[%s2 + $0x38] sm:$0xff]
      %712 = vset.pattern.permute.xlu0 0
      %713 = vperm.xlu0 %712, %v703
      %v714 = vpop.permute.xlu0 %713
      %717 = vset.pattern.permute.xlu0 0
      %718 = vperm.xlu0 %717, %v704
      %v719 = vpop.permute.xlu0 %718
      %722 = vset.pattern.permute.xlu0 0
      %723 = vperm.xlu0 %722, %v705
      %v724 = vpop.permute.xlu0 %723
      %727 = vset.pattern.permute.xlu0 0
      %728 = vperm.xlu0 %727, %v706
      %v729 = vpop.permute.xlu0 %728
      %732 = vset.pattern.permute.xlu0 0
      %733 = vperm.xlu0 %732, %v707
      %v734 = vpop.permute.xlu0 %733
      %737 = vset.pattern.permute.xlu0 0
      %738 = vperm.xlu0 %737, %v708
      %v739 = vpop.permute.xlu0 %738
      %742 = vset.pattern.permute.xlu0 0
      %743 = vperm.xlu0 %742, %v709
      %v744 = vpop.permute.xlu0 %743
      %747 = vset.pattern.permute.xlu0 0
      %748 = vperm.xlu0 %747, %v710
      %v749 = vpop.permute.xlu0 %748
      %v751 = vadd.f32 %v695, %v714
      %v752 = vadd.f32 %v696, %v719
      %v753 = vadd.f32 %v697, %v724
      %v754 = vadd.f32 %v698, %v729
      %v755 = vadd.f32 %v699, %v734
      %v756 = vadd.f32 %v700, %v739
      %v757 = vadd.f32 %v701, %v744
      %v758 = vadd.f32 %v702, %v749
      %v759 = vsub.f32 0.0, %v751
      %v760 = vsub.f32 0.0, %v752
      %v761 = vsub.f32 0.0, %v753
      %v762 = vsub.f32 0.0, %v754
      %v763 = vsub.f32 0.0, %v755
      %v764 = vsub.f32 0.0, %v756
      %v765 = vsub.f32 0.0, %v757
      %v766 = vsub.f32 0.0, %v758
      %v767 = vmul.f32 %v759, 1.442695
      %v768 = vpow.pop %v767
      %v769 = vmul.f32 %v760, 1.442695
      %v770 = vpow.pop %v769
      %v771 = vmul.f32 %v761, 1.442695
      %v772 = vpow.pop %v771
      %v773 = vmul.f32 %v762, 1.442695
      %v774 = vpow.pop %v773
      %v775 = vmul.f32 %v763, 1.442695
      %v776 = vpow.pop %v775
      %v777 = vmul.f32 %v764, 1.442695
      %v778 = vpow.pop %v777
      %v779 = vmul.f32 %v765, 1.442695
      %v780 = vpow.pop %v779
      %v781 = vmul.f32 %v766, 1.442695
      %v782 = vpow.pop %v781
      %v783 = vadd.f32 %v768, 1.0
      %v784 = vadd.f32 %v770, 1.0
      %v785 = vadd.f32 %v772, 1.0
      %v786 = vadd.f32 %v774, 1.0
      %v787 = vadd.f32 %v776, 1.0
      %v788 = vadd.f32 %v778, 1.0
      %v789 = vadd.f32 %v780, 1.0
      %v790 = vadd.f32 %v782, 1.0
      %v791 = vrcp.pop %v783
      %v792 = vrcp.pop %v784
      %v793 = vrcp.pop %v785
      %v794 = vrcp.pop %v786
      %v795 = vrcp.pop %v787
      %v796 = vrcp.pop %v788
      %v797 = vrcp.pop %v789
      %v798 = vrcp.pop %v790
      %v799 = vmul.f32 %v751, %v791
      %v800 = vmul.f32 %v752, %v792
      %v801 = vmul.f32 %v753, %v793
      %v802 = vmul.f32 %v754, %v794
      %v803 = vmul.f32 %v755, %v795
      %v804 = vmul.f32 %v756, %v796
      %v805 = vmul.f32 %v757, %v797
      %v806 = vmul.f32 %v758, %v798
      %807 = vadd.xlane.f32.xlu0 %v799
      %v808 = vpop.xlane.xlu0 %807
      %809 = vadd.xlane.f32.xlu0 %v800
      %v810 = vpop.xlane.xlu0 %809
      %811 = vadd.xlane.f32.xlu0 %v801
      %v812 = vpop.xlane.xlu0 %811
      %813 = vadd.xlane.f32.xlu0 %v802
      %v814 = vpop.xlane.xlu0 %813
      %815 = vadd.xlane.f32.xlu0 %v803
      %v816 = vpop.xlane.xlu0 %815
      %817 = vadd.xlane.f32.xlu0 %v804
      %v818 = vpop.xlane.xlu0 %817
      %819 = vadd.xlane.f32.xlu0 %v805
      %v820 = vpop.xlane.xlu0 %819
      %821 = vadd.xlane.f32.xlu0 %v806
      %v822 = vpop.xlane.xlu0 %821
      %v823 = vadd.f32 %v808, 0.0
      %v824 = vadd.f32 %v810, 0.0
      %v825 = vadd.f32 %v812, 0.0
      %v826 = vadd.f32 %v814, 0.0
      %v827 = vadd.f32 %v816, 0.0
      %v828 = vadd.f32 %v818, 0.0
      %v829 = vadd.f32 %v820, 0.0
      %v830 = vadd.f32 %v822, 0.0
      %v831 = vmul.f32 %v799, %v799
      %v832 = vmul.f32 %v800, %v800
      %v833 = vmul.f32 %v801, %v801
      %v834 = vmul.f32 %v802, %v802
      %v835 = vmul.f32 %v803, %v803
      %v836 = vmul.f32 %v804, %v804
      %v837 = vmul.f32 %v805, %v805
      %v838 = vmul.f32 %v806, %v806
      %839 = vadd.xlane.f32.xlu0 %v831
      %v840 = vpop.xlane.xlu0 %839
      %841 = vadd.xlane.f32.xlu0 %v832
      %v842 = vpop.xlane.xlu0 %841
      %843 = vadd.xlane.f32.xlu0 %v833
      %v844 = vpop.xlane.xlu0 %843
      %845 = vadd.xlane.f32.xlu0 %v834
      %v846 = vpop.xlane.xlu0 %845
      %847 = vadd.xlane.f32.xlu0 %v835
      %v848 = vpop.xlane.xlu0 %847
      %849 = vadd.xlane.f32.xlu0 %v836
      %v850 = vpop.xlane.xlu0 %849
      %851 = vadd.xlane.f32.xlu0 %v837
      %v852 = vpop.xlane.xlu0 %851
      %853 = vadd.xlane.f32.xlu0 %v838
      %v854 = vpop.xlane.xlu0 %853
      %v855 = vadd.f32 %v840, 0.0
      %v856 = vadd.f32 %v842, 0.0
      %v857 = vadd.f32 %v844, 0.0
      %v858 = vadd.f32 %v846, 0.0
      %v859 = vadd.f32 %v848, 0.0
      %v860 = vadd.f32 %v850, 0.0
      %v861 = vadd.f32 %v852, 0.0
      %v862 = vadd.f32 %v854, 0.0
      %s863 = scalar_lea.vmem %s184, 64
      %v864 = vld [vmem:[%s863] sm:$0xff]
      %v865 = vld [vmem:[%s863 + $0x8] sm:$0xff]
      %v866 = vld [vmem:[%s863 + $0x10] sm:$0xff]
      %v867 = vld [vmem:[%s863 + $0x18] sm:$0xff]
      %v868 = vld [vmem:[%s863 + $0x20] sm:$0xff]
      %v869 = vld [vmem:[%s863 + $0x28] sm:$0xff]
      %v870 = vld [vmem:[%s863 + $0x30] sm:$0xff]
      %v871 = vld [vmem:[%s863 + $0x38] sm:$0x1]
      %872 = vrot.lane.b32.xlu0 %v864, 1
      %v873 = vpop.permute.xlu0 %872
      %874 = vrot.lane.b32.xlu0 %v865, 1
      %v875 = vpop.permute.xlu0 %874
      %876 = vrot.lane.b32.xlu0 %v866, 1
      %v877 = vpop.permute.xlu0 %876
      %878 = vrot.lane.b32.xlu0 %v867, 1
      %v879 = vpop.permute.xlu0 %878
      %880 = vrot.lane.b32.xlu0 %v868, 1
      %v881 = vpop.permute.xlu0 %880
      %882 = vrot.lane.b32.xlu0 %v869, 1
      %v883 = vpop.permute.xlu0 %882
      %884 = vrot.lane.b32.xlu0 %v870, 1
      %v885 = vpop.permute.xlu0 %884
      %886 = vrot.lane.b32.xlu0 %v871, 1
      %v887 = vpop.permute.xlu0 %886
      %v888 = vsel %vm236, 0.0, %v873
      %v889 = vsel %vm236, 0.0, %v875
      %v890 = vsel %vm236, 0.0, %v877
      %v891 = vsel %vm236, 0.0, %v879
      %v892 = vsel %vm236, 0.0, %v881
      %v893 = vsel %vm236, 0.0, %v883
      %v894 = vsel %vm236, 0.0, %v885
      %v895 = vsel %vm236, 0.0, %v887
      %896 = vrot.lane.b32.xlu0 %v864, 127
      %v897 = vpop.permute.xlu0 %896
      %898 = vrot.lane.b32.xlu0 %v865, 127
      %v899 = vpop.permute.xlu0 %898
      %900 = vrot.lane.b32.xlu0 %v866, 127
      %v901 = vpop.permute.xlu0 %900
      %902 = vrot.lane.b32.xlu0 %v867, 127
      %v903 = vpop.permute.xlu0 %902
      %904 = vrot.lane.b32.xlu0 %v868, 127
      %v905 = vpop.permute.xlu0 %904
      %906 = vrot.lane.b32.xlu0 %v869, 127
      %v907 = vpop.permute.xlu0 %906
      %908 = vrot.lane.b32.xlu0 %v870, 127
      %v909 = vpop.permute.xlu0 %908
      %910 = vrot.lane.b32.xlu0 %v871, 127
      %v911 = vpop.permute.xlu0 %910
      %v912 = vsel %vm262, 0.0, %v897
      %v913 = vsel %vm262, 0.0, %v899
      %v914 = vsel %vm262, 0.0, %v901
      %v915 = vsel %vm262, 0.0, %v903
      %v916 = vsel %vm262, 0.0, %v905
      %v917 = vsel %vm262, 0.0, %v907
      %v918 = vsel %vm262, 0.0, %v909
      %v919 = vsel %vm262, 0.0, %v911
      %v921 = vsel %vm313, %v871, 0
      %923 = vmatprep.subr.mxu0 0.0
      %924 = vmatpush1.msra.mxu0 %v864
      %925 = vmatprep.subr.mxu0 0.0
      %926 = vmatpush1.msra.mxu0 %v865
      %927 = vmatprep.subr.mxu0 0.0
      %928 = vmatpush1.msra.mxu0 %v866
      %929 = vmatprep.subr.mxu0 0.0
      %930 = vmatpush1.msra.mxu0 %v867
      %931 = vmatprep.subr.mxu0 0.0
      %932 = vmatpush1.msra.mxu0 %v868
      %933 = vmatprep.subr.mxu0 0.0
      %934 = vmatpush1.msra.mxu0 %v869
      %935 = vmatprep.subr.mxu0 0.0
      %936 = vmatpush1.msra.mxu0 %v870
      %937 = vmatprep.subr.mxu0 0.0
      %938 = vmatpush1.msra.mxu0 %v921
      %939 = vmatprep.subr.mxu0 0.0
      %940 = vmatpush1.msra.mxu0 0.0
      %941 = vmatprep.subr.mxu0 0.0
      %942 = vmatpush1.msra.mxu0 0.0
      %943 = vmatprep.subr.mxu0 0.0
      %944 = vmatpush1.msra.mxu0 0.0
      %945 = vmatprep.subr.mxu0 0.0
      %946 = vmatpush1.msra.mxu0 0.0
      %947 = vmatprep.subr.mxu0 0.0
      %948 = vmatpush1.msra.mxu0 0.0
      %949 = vmatprep.subr.mxu0 0.0
      %950 = vmatpush1.msra.mxu0 0.0
      %951 = vmatprep.subr.mxu0 0.0
      %952 = vmatpush1.msra.mxu0 0.0
      %953 = vmatprep.subr.mxu0 0.0
      %954 = vmatpush1.msra.mxu0 0.0
      %955 = vmatprep.subr.mxu0 0.0
      %956 = vmatpush1.msra.mxu0 0.0
      %957 = vmatprep.subr.mxu0 0.0
      %958 = vmatpush1.msra.mxu0 0.0
      %959 = vmatprep.subr.mxu0 0.0
      %960 = vmatpush1.msra.mxu0 0.0
      %961 = vmatprep.subr.mxu0 0.0
      %962 = vmatpush1.msra.mxu0 0.0
      %963 = vmatprep.subr.mxu0 0.0
      %964 = vmatpush1.msra.mxu0 0.0
      %965 = vmatprep.subr.mxu0 0.0
      %966 = vmatpush1.msra.mxu0 0.0
      %967 = vmatprep.subr.mxu0 0.0
      %968 = vmatpush1.msra.mxu0 0.0
      %969 = vmatprep.subr.mxu0 0.0
      %970 = vmatpush1.msra.mxu0 0.0
      %971 = vmatprep.subr.mxu0 0.0
      %972 = vmatpush1.msra.mxu0 0.0
      %973 = vmatprep.subr.mxu0 0.0
      %974 = vmatpush1.msra.mxu0 0.0
      %975 = vmatprep.subr.mxu0 0.0
      %976 = vmatpush1.msra.mxu0 0.0
      %977 = vmatprep.subr.mxu0 0.0
      %978 = vmatpush1.msra.mxu0 0.0
      %979 = vmatprep.subr.mxu0 0.0
      %980 = vmatpush1.msra.mxu0 0.0
      %981 = vmatprep.subr.mxu0 0.0
      %982 = vmatpush1.msra.mxu0 0.0
      %983 = vmatprep.subr.mxu0 0.0
      %984 = vmatpush1.msra.mxu0 0.0
      %985 = vmatprep.subr.mxu0 0.0
      %986 = vmatpush1.msra.mxu0 0.0
      %987 = vmatprep.mubr.f32.mxu0 0.0
      %988 = vmatmul.mubr.f32.gmra.mrb[0].mxu0 %v290
      %v989 = vpop.f32.mrb[0].mxu0
      %v990 = vadd.f32 0.0, %v989
      %v991 = vpop.f32.mrb[0].mxu0
      %992 = vmatprep.mubr.f32.mxu0 0.0
      %993 = vmatmul.mubr.f32.gmra.mrb[0].mxu0 %v293
      %v994 = vpop.f32.mrb[0].mxu0
      %v995 = vadd.f32 0.0, %v994
      %v996 = vpop.f32.mrb[0].mxu0
      %997 = vmatprep.mubr.f32.mxu0 0.0
      %998 = vmatmul.mubr.f32.gmra.mrb[0].mxu0 %v296
      %v999 = vpop.f32.mrb[0].mxu0
      %v1000 = vadd.f32 0.0, %v999
      %v1001 = vpop.f32.mrb[0].mxu0
      %1002 = vmatprep.mubr.f32.mxu0 0.0
      %1003 = vmatmul.mubr.f32.gmra.mrb[0].mxu0 %v299
      %v1004 = vpop.f32.mrb[0].mxu0
      %v1005 = vadd.f32 0.0, %v1004
      %v1006 = vpop.f32.mrb[0].mxu0
      %1007 = vmatprep.mubr.f32.mxu0 0.0
      %1008 = vmatmul.mubr.f32.gmra.mrb[0].mxu0 %v302
      %v1009 = vpop.f32.mrb[0].mxu0
      %v1010 = vadd.f32 0.0, %v1009
      %v1011 = vpop.f32.mrb[0].mxu0
      %1012 = vmatprep.mubr.f32.mxu0 0.0
      %1013 = vmatmul.mubr.f32.gmra.mrb[0].mxu0 %v305
      %v1014 = vpop.f32.mrb[0].mxu0
      %v1015 = vadd.f32 0.0, %v1014
      %v1016 = vpop.f32.mrb[0].mxu0
      %1017 = vmatprep.mubr.f32.mxu0 0.0
      %1018 = vmatmul.mubr.f32.gmra.mrb[0].mxu0 %v308
      %v1019 = vpop.f32.mrb[0].mxu0
      %v1020 = vadd.f32 0.0, %v1019
      %v1021 = vpop.f32.mrb[0].mxu0
      %1022 = vmatprep.mubr.f32.mxu0 0.0
      %1023 = vmatmul.mubr.f32.gmra.mrb[0].mxu0 %v311
      %v1024 = vpop.f32.mrb[0].mxu0
      %v1025 = vadd.f32 0.0, %v1024
      %v1026 = vpop.f32.mrb[0].mxu0
      %1027 = vdwg.mxu0
      %v1029 = vsel %vm313, %v895, 0
      %1031 = vmatprep.subr.mxu0 0.0
      %1032 = vmatpush1.msra.mxu0 %v888
      %1033 = vmatprep.subr.mxu0 0.0
      %1034 = vmatpush1.msra.mxu0 %v889
      %1035 = vmatprep.subr.mxu0 0.0
      %1036 = vmatpush1.msra.mxu0 %v890
      %1037 = vmatprep.subr.mxu0 0.0
      %1038 = vmatpush1.msra.mxu0 %v891
      %1039 = vmatprep.subr.mxu0 0.0
      %1040 = vmatpush1.msra.mxu0 %v892
      %1041 = vmatprep.subr.mxu0 0.0
      %1042 = vmatpush1.msra.mxu0 %v893
      %1043 = vmatprep.subr.mxu0 0.0
      %1044 = vmatpush1.msra.mxu0 %v894
      %1045 = vmatprep.subr.mxu0 0.0
      %1046 = vmatpush1.msra.mxu0 %v1029
      %1047 = vmatprep.subr.mxu0 0.0
      %1048 = vmatpush1.msra.mxu0 0.0
      %1049 = vmatprep.subr.mxu0 0.0
      %1050 = vmatpush1.msra.mxu0 0.0
      %1051 = vmatprep.subr.mxu0 0.0
      %1052 = vmatpush1.msra.mxu0 0.0
      %1053 = vmatprep.subr.mxu0 0.0
      %1054 = vmatpush1.msra.mxu0 0.0
      %1055 = vmatprep.subr.mxu0 0.0
      %1056 = vmatpush1.msra.mxu0 0.0
      %1057 = vmatprep.subr.mxu0 0.0
      %1058 = vmatpush1.msra.mxu0 0.0
      %1059 = vmatprep.subr.mxu0 0.0
      %1060 = vmatpush1.msra.mxu0 0.0
      %1061 = vmatprep.subr.mxu0 0.0
      %1062 = vmatpush1.msra.mxu0 0.0
      %1063 = vmatprep.subr.mxu0 0.0
      %1064 = vmatpush1.msra.mxu0 0.0
      %1065 = vmatprep.subr.mxu0 0.0
      %1066 = vmatpush1.msra.mxu0 0.0
      %1067 = vmatprep.subr.mxu0 0.0
      %1068 = vmatpush1.msra.mxu0 0.0
      %1069 = vmatprep.subr.mxu0 0.0
      %1070 = vmatpush1.msra.mxu0 0.0
      %1071 = vmatprep.subr.mxu0 0.0
      %1072 = vmatpush1.msra.mxu0 0.0
      %1073 = vmatprep.subr.mxu0 0.0
      %1074 = vmatpush1.msra.mxu0 0.0
      %1075 = vmatprep.subr.mxu0 0.0
      %1076 = vmatpush1.msra.mxu0 0.0
      %1077 = vmatprep.subr.mxu0 0.0
      %1078 = vmatpush1.msra.mxu0 0.0
      %1079 = vmatprep.subr.mxu0 0.0
      %1080 = vmatpush1.msra.mxu0 0.0
      %1081 = vmatprep.subr.mxu0 0.0
      %1082 = vmatpush1.msra.mxu0 0.0
      %1083 = vmatprep.subr.mxu0 0.0
      %1084 = vmatpush1.msra.mxu0 0.0
      %1085 = vmatprep.subr.mxu0 0.0
      %1086 = vmatpush1.msra.mxu0 0.0
      %1087 = vmatprep.subr.mxu0 0.0
      %1088 = vmatpush1.msra.mxu0 0.0
      %1089 = vmatprep.subr.mxu0 0.0
      %1090 = vmatpush1.msra.mxu0 0.0
      %1091 = vmatprep.subr.mxu0 0.0
      %1092 = vmatpush1.msra.mxu0 0.0
      %1093 = vmatprep.subr.mxu0 0.0
      %1094 = vmatpush1.msra.mxu0 0.0
      %1095 = vmatprep.mubr.f32.mxu0 0.0
      %1096 = vmatmul.mubr.f32.gmra.mrb[0].mxu0 %v423
      %v1097 = vpop.f32.mrb[0].mxu0
      %v1098 = vadd.f32 %v990, %v1097
      %v1099 = vpop.f32.mrb[0].mxu0
      %1100 = vmatprep.mubr.f32.mxu0 0.0
      %1101 = vmatmul.mubr.f32.gmra.mrb[0].mxu0 %v426
      %v1102 = vpop.f32.mrb[0].mxu0
      %v1103 = vadd.f32 %v995, %v1102
      %v1104 = vpop.f32.mrb[0].mxu0
      %1105 = vmatprep.mubr.f32.mxu0 0.0
      %1106 = vmatmul.mubr.f32.gmra.mrb[0].mxu0 %v429
      %v1107 = vpop.f32.mrb[0].mxu0
      %v1108 = vadd.f32 %v1000, %v1107
      %v1109 = vpop.f32.mrb[0].mxu0
      %1110 = vmatprep.mubr.f32.mxu0 0.0
      %1111 = vmatmul.mubr.f32.gmra.mrb[0].mxu0 %v432
      %v1112 = vpop.f32.mrb[0].mxu0
      %v1113 = vadd.f32 %v1005, %v1112
      %v1114 = vpop.f32.mrb[0].mxu0
      %1115 = vmatprep.mubr.f32.mxu0 0.0
      %1116 = vmatmul.mubr.f32.gmra.mrb[0].mxu0 %v435
      %v1117 = vpop.f32.mrb[0].mxu0
      %v1118 = vadd.f32 %v1010, %v1117
      %v1119 = vpop.f32.mrb[0].mxu0
      %1120 = vmatprep.mubr.f32.mxu0 0.0
      %1121 = vmatmul.mubr.f32.gmra.mrb[0].mxu0 %v438
      %v1122 = vpop.f32.mrb[0].mxu0
      %v1123 = vadd.f32 %v1015, %v1122
      %v1124 = vpop.f32.mrb[0].mxu0
      %1125 = vmatprep.mubr.f32.mxu0 0.0
      %1126 = vmatmul.mubr.f32.gmra.mrb[0].mxu0 %v441
      %v1127 = vpop.f32.mrb[0].mxu0
      %v1128 = vadd.f32 %v1020, %v1127
      %v1129 = vpop.f32.mrb[0].mxu0
      %1130 = vmatprep.mubr.f32.mxu0 0.0
      %1131 = vmatmul.mubr.f32.gmra.mrb[0].mxu0 %v444
      %v1132 = vpop.f32.mrb[0].mxu0
      %v1133 = vadd.f32 %v1025, %v1132
      %v1134 = vpop.f32.mrb[0].mxu0
      %1135 = vdwg.mxu0
      %v1137 = vsel %vm313, %v919, 0
      %1139 = vmatprep.subr.mxu0 0.0
      %1140 = vmatpush1.msra.mxu0 %v912
      %1141 = vmatprep.subr.mxu0 0.0
      %1142 = vmatpush1.msra.mxu0 %v913
      %1143 = vmatprep.subr.mxu0 0.0
      %1144 = vmatpush1.msra.mxu0 %v914
      %1145 = vmatprep.subr.mxu0 0.0
      %1146 = vmatpush1.msra.mxu0 %v915
      %1147 = vmatprep.subr.mxu0 0.0
      %1148 = vmatpush1.msra.mxu0 %v916
      %1149 = vmatprep.subr.mxu0 0.0
      %1150 = vmatpush1.msra.mxu0 %v917
      %1151 = vmatprep.subr.mxu0 0.0
      %1152 = vmatpush1.msra.mxu0 %v918
      %1153 = vmatprep.subr.mxu0 0.0
      %1154 = vmatpush1.msra.mxu0 %v1137
      %1155 = vmatprep.subr.mxu0 0.0
      %1156 = vmatpush1.msra.mxu0 0.0
      %1157 = vmatprep.subr.mxu0 0.0
      %1158 = vmatpush1.msra.mxu0 0.0
      %1159 = vmatprep.subr.mxu0 0.0
      %1160 = vmatpush1.msra.mxu0 0.0
      %1161 = vmatprep.subr.mxu0 0.0
      %1162 = vmatpush1.msra.mxu0 0.0
      %1163 = vmatprep.subr.mxu0 0.0
      %1164 = vmatpush1.msra.mxu0 0.0
      %1165 = vmatprep.subr.mxu0 0.0
      %1166 = vmatpush1.msra.mxu0 0.0
      %1167 = vmatprep.subr.mxu0 0.0
      %1168 = vmatpush1.msra.mxu0 0.0
      %1169 = vmatprep.subr.mxu0 0.0
      %1170 = vmatpush1.msra.mxu0 0.0
      %1171 = vmatprep.subr.mxu0 0.0
      %1172 = vmatpush1.msra.mxu0 0.0
      %1173 = vmatprep.subr.mxu0 0.0
      %1174 = vmatpush1.msra.mxu0 0.0
      %1175 = vmatprep.subr.mxu0 0.0
      %1176 = vmatpush1.msra.mxu0 0.0
      %1177 = vmatprep.subr.mxu0 0.0
      %1178 = vmatpush1.msra.mxu0 0.0
      %1179 = vmatprep.subr.mxu0 0.0
      %1180 = vmatpush1.msra.mxu0 0.0
      %1181 = vmatprep.subr.mxu0 0.0
      %1182 = vmatpush1.msra.mxu0 0.0
      %1183 = vmatprep.subr.mxu0 0.0
      %1184 = vmatpush1.msra.mxu0 0.0
      %1185 = vmatprep.subr.mxu0 0.0
      %1186 = vmatpush1.msra.mxu0 0.0
      %1187 = vmatprep.subr.mxu0 0.0
      %1188 = vmatpush1.msra.mxu0 0.0
      %1189 = vmatprep.subr.mxu0 0.0
      %1190 = vmatpush1.msra.mxu0 0.0
      %1191 = vmatprep.subr.mxu0 0.0
      %1192 = vmatpush1.msra.mxu0 0.0
      %1193 = vmatprep.subr.mxu0 0.0
      %1194 = vmatpush1.msra.mxu0 0.0
      %1195 = vmatprep.subr.mxu0 0.0
      %1196 = vmatpush1.msra.mxu0 0.0
      %1197 = vmatprep.subr.mxu0 0.0
      %1198 = vmatpush1.msra.mxu0 0.0
      %1199 = vmatprep.subr.mxu0 0.0
      %1200 = vmatpush1.msra.mxu0 0.0
      %1201 = vmatprep.subr.mxu0 0.0
      %1202 = vmatpush1.msra.mxu0 0.0
      %1203 = vmatprep.mubr.f32.mxu0 0.0
      %1204 = vmatmul.mubr.f32.gmra.mrb[0].mxu0 %v564
      %v1205 = vpop.f32.mrb[0].mxu0
      %v1206 = vadd.f32 0.0, %v1205
      %v1207 = vpop.f32.mrb[0].mxu0
      %1208 = vmatprep.mubr.f32.mxu0 0.0
      %1209 = vmatmul.mubr.f32.gmra.mrb[0].mxu0 %v567
      %v1210 = vpop.f32.mrb[0].mxu0
      %v1211 = vadd.f32 0.0, %v1210
      %v1212 = vpop.f32.mrb[0].mxu0
      %1213 = vmatprep.mubr.f32.mxu0 0.0
      %1214 = vmatmul.mubr.f32.gmra.mrb[0].mxu0 %v570
      %v1215 = vpop.f32.mrb[0].mxu0
      %v1216 = vadd.f32 0.0, %v1215
      %v1217 = vpop.f32.mrb[0].mxu0
      %1218 = vmatprep.mubr.f32.mxu0 0.0
      %1219 = vmatmul.mubr.f32.gmra.mrb[0].mxu0 %v573
      %v1220 = vpop.f32.mrb[0].mxu0
      %v1221 = vadd.f32 0.0, %v1220
      %v1222 = vpop.f32.mrb[0].mxu0
      %1223 = vmatprep.mubr.f32.mxu0 0.0
      %1224 = vmatmul.mubr.f32.gmra.mrb[0].mxu0 %v576
      %v1225 = vpop.f32.mrb[0].mxu0
      %v1226 = vadd.f32 0.0, %v1225
      %v1227 = vpop.f32.mrb[0].mxu0
      %1228 = vmatprep.mubr.f32.mxu0 0.0
      %1229 = vmatmul.mubr.f32.gmra.mrb[0].mxu0 %v579
      %v1230 = vpop.f32.mrb[0].mxu0
      %v1231 = vadd.f32 0.0, %v1230
      %v1232 = vpop.f32.mrb[0].mxu0
      %1233 = vmatprep.mubr.f32.mxu0 0.0
      %1234 = vmatmul.mubr.f32.gmra.mrb[0].mxu0 %v582
      %v1235 = vpop.f32.mrb[0].mxu0
      %v1236 = vadd.f32 0.0, %v1235
      %v1237 = vpop.f32.mrb[0].mxu0
      %1238 = vmatprep.mubr.f32.mxu0 0.0
      %1239 = vmatmul.mubr.f32.gmra.mrb[0].mxu0 %v585
      %v1240 = vpop.f32.mrb[0].mxu0
      %v1241 = vadd.f32 0.0, %v1240
      %v1242 = vpop.f32.mrb[0].mxu0
      %1243 = vdwg.mxu0
      %v1244 = vadd.f32 %v1098, %v1206
      %v1245 = vadd.f32 %v1103, %v1211
      %v1246 = vadd.f32 %v1108, %v1216
      %v1247 = vadd.f32 %v1113, %v1221
      %v1248 = vadd.f32 %v1118, %v1226
      %v1249 = vadd.f32 %v1123, %v1231
      %v1250 = vadd.f32 %v1128, %v1236
      %v1251 = vadd.f32 %v1133, %v1241
      %v1252 = vadd.f32 %v1244, %v714
      %v1253 = vadd.f32 %v1245, %v719
      %v1254 = vadd.f32 %v1246, %v724
      %v1255 = vadd.f32 %v1247, %v729
      %v1256 = vadd.f32 %v1248, %v734
      %v1257 = vadd.f32 %v1249, %v739
      %v1258 = vadd.f32 %v1250, %v744
      %v1259 = vadd.f32 %v1251, %v749
      %v1260 = vsub.f32 0.0, %v1252
      %v1261 = vsub.f32 0.0, %v1253
      %v1262 = vsub.f32 0.0, %v1254
      %v1263 = vsub.f32 0.0, %v1255
      %v1264 = vsub.f32 0.0, %v1256
      %v1265 = vsub.f32 0.0, %v1257
      %v1266 = vsub.f32 0.0, %v1258
      %v1267 = vsub.f32 0.0, %v1259
      %v1268 = vmul.f32 %v1260, 1.442695
      %v1269 = vpow.pop %v1268
      %v1270 = vmul.f32 %v1261, 1.442695
      %v1271 = vpow.pop %v1270
      %v1272 = vmul.f32 %v1262, 1.442695
      %v1273 = vpow.pop %v1272
      %v1274 = vmul.f32 %v1263, 1.442695
      %v1275 = vpow.pop %v1274
      %v1276 = vmul.f32 %v1264, 1.442695
      %v1277 = vpow.pop %v1276
      %v1278 = vmul.f32 %v1265, 1.442695
      %v1279 = vpow.pop %v1278
      %v1280 = vmul.f32 %v1266, 1.442695
      %v1281 = vpow.pop %v1280
      %v1282 = vmul.f32 %v1267, 1.442695
      %v1283 = vpow.pop %v1282
      %v1284 = vadd.f32 %v1269, 1.0
      %v1285 = vadd.f32 %v1271, 1.0
      %v1286 = vadd.f32 %v1273, 1.0
      %v1287 = vadd.f32 %v1275, 1.0
      %v1288 = vadd.f32 %v1277, 1.0
      %v1289 = vadd.f32 %v1279, 1.0
      %v1290 = vadd.f32 %v1281, 1.0
      %v1291 = vadd.f32 %v1283, 1.0
      %v1292 = vrcp.pop %v1284
      %v1293 = vrcp.pop %v1285
      %v1294 = vrcp.pop %v1286
      %v1295 = vrcp.pop %v1287
      %v1296 = vrcp.pop %v1288
      %v1297 = vrcp.pop %v1289
      %v1298 = vrcp.pop %v1290
      %v1299 = vrcp.pop %v1291
      %v1300 = vmul.f32 %v1252, %v1292
      %v1301 = vmul.f32 %v1253, %v1293
      %v1302 = vmul.f32 %v1254, %v1294
      %v1303 = vmul.f32 %v1255, %v1295
      %v1304 = vmul.f32 %v1256, %v1296
      %v1305 = vmul.f32 %v1257, %v1297
      %v1306 = vmul.f32 %v1258, %v1298
      %v1307 = vmul.f32 %v1259, %v1299
      %1308 = vadd.xlane.f32.xlu0 %v1300
      %v1309 = vpop.xlane.xlu0 %1308
      %1310 = vadd.xlane.f32.xlu0 %v1301
      %v1311 = vpop.xlane.xlu0 %1310
      %1312 = vadd.xlane.f32.xlu0 %v1302
      %v1313 = vpop.xlane.xlu0 %1312
      %1314 = vadd.xlane.f32.xlu0 %v1303
      %v1315 = vpop.xlane.xlu0 %1314
      %1316 = vadd.xlane.f32.xlu0 %v1304
      %v1317 = vpop.xlane.xlu0 %1316
      %1318 = vadd.xlane.f32.xlu0 %v1305
      %v1319 = vpop.xlane.xlu0 %1318
      %1320 = vadd.xlane.f32.xlu0 %v1306
      %v1321 = vpop.xlane.xlu0 %1320
      %1322 = vadd.xlane.f32.xlu0 %v1307
      %v1323 = vpop.xlane.xlu0 %1322
      %v1324 = vadd.f32 %v823, %v1309
      %v1325 = vadd.f32 %v824, %v1311
      %v1326 = vadd.f32 %v825, %v1313
      %v1327 = vadd.f32 %v826, %v1315
      %v1328 = vadd.f32 %v827, %v1317
      %v1329 = vadd.f32 %v828, %v1319
      %v1330 = vadd.f32 %v829, %v1321
      %v1331 = vadd.f32 %v830, %v1323
      %v1332 = vmul.f32 %v1300, %v1300
      %v1333 = vmul.f32 %v1301, %v1301
      %v1334 = vmul.f32 %v1302, %v1302
      %v1335 = vmul.f32 %v1303, %v1303
      %v1336 = vmul.f32 %v1304, %v1304
      %v1337 = vmul.f32 %v1305, %v1305
      %v1338 = vmul.f32 %v1306, %v1306
      %v1339 = vmul.f32 %v1307, %v1307
      %1340 = vadd.xlane.f32.xlu0 %v1332
      %v1341 = vpop.xlane.xlu0 %1340
      %1342 = vadd.xlane.f32.xlu0 %v1333
      %v1343 = vpop.xlane.xlu0 %1342
      %1344 = vadd.xlane.f32.xlu0 %v1334
      %v1345 = vpop.xlane.xlu0 %1344
      %1346 = vadd.xlane.f32.xlu0 %v1335
      %v1347 = vpop.xlane.xlu0 %1346
      %1348 = vadd.xlane.f32.xlu0 %v1336
      %v1349 = vpop.xlane.xlu0 %1348
      %1350 = vadd.xlane.f32.xlu0 %v1337
      %v1351 = vpop.xlane.xlu0 %1350
      %1352 = vadd.xlane.f32.xlu0 %v1338
      %v1353 = vpop.xlane.xlu0 %1352
      %1354 = vadd.xlane.f32.xlu0 %v1339
      %v1355 = vpop.xlane.xlu0 %1354
      %v1356 = vadd.f32 %v855, %v1341
      %v1357 = vadd.f32 %v856, %v1343
      %v1358 = vadd.f32 %v857, %v1345
      %v1359 = vadd.f32 %v858, %v1347
      %v1360 = vadd.f32 %v859, %v1349
      %v1361 = vadd.f32 %v860, %v1351
      %v1362 = vadd.f32 %v861, %v1353
      %v1363 = vadd.f32 %v862, %v1355
      %v1364 = vld [vmem:[%s3] sm:$0xff]
      %v1365 = vld [vmem:[%s3 + $0x8] sm:$0xff]
      %v1366 = vld [vmem:[%s3 + $0x10] sm:$0xff]
      %v1367 = vld [vmem:[%s3 + $0x18] sm:$0xff]
      %v1368 = vld [vmem:[%s3 + $0x20] sm:$0xff]
      %v1369 = vld [vmem:[%s3 + $0x28] sm:$0xff]
      %v1370 = vld [vmem:[%s3 + $0x30] sm:$0xff]
      %v1371 = vld [vmem:[%s3 + $0x38] sm:$0xff]
      %v1372 = vadd.f32 %v1364, %v1324
      %v1373 = vadd.f32 %v1365, %v1325
      %v1374 = vadd.f32 %v1366, %v1326
      %v1375 = vadd.f32 %v1367, %v1327
      %v1376 = vadd.f32 %v1368, %v1328
      %v1377 = vadd.f32 %v1369, %v1329
      %v1378 = vadd.f32 %v1370, %v1330
      %v1379 = vadd.f32 %v1371, %v1331
      %vm1380 = vcmask 7168
      %1381 = vst.msk [vmem:[%s3] sm:$0xff] %vm1380, %v1372
      %1382 = vst.msk [vmem:[%s3 + $0x8] sm:$0xff] %vm1380, %v1373
      %1383 = vst.msk [vmem:[%s3 + $0x10] sm:$0xff] %vm1380, %v1374
      %1384 = vst.msk [vmem:[%s3 + $0x18] sm:$0xff] %vm1380, %v1375
      %1385 = vst.msk [vmem:[%s3 + $0x20] sm:$0xff] %vm1380, %v1376
      %1386 = vst.msk [vmem:[%s3 + $0x28] sm:$0xff] %vm1380, %v1377
      %1387 = vst.msk [vmem:[%s3 + $0x30] sm:$0xff] %vm1380, %v1378
      %1388 = vst.msk [vmem:[%s3 + $0x38] sm:$0xff] %vm1380, %v1379
      %v1389 = vld [vmem:[%s4] sm:$0xff]
      %v1390 = vld [vmem:[%s4 + $0x8] sm:$0xff]
      %v1391 = vld [vmem:[%s4 + $0x10] sm:$0xff]
      %v1392 = vld [vmem:[%s4 + $0x18] sm:$0xff]
      %v1393 = vld [vmem:[%s4 + $0x20] sm:$0xff]
      %v1394 = vld [vmem:[%s4 + $0x28] sm:$0xff]
      %v1395 = vld [vmem:[%s4 + $0x30] sm:$0xff]
      %v1396 = vld [vmem:[%s4 + $0x38] sm:$0xff]
      %v1397 = vadd.f32 %v1389, %v1356
      %v1398 = vadd.f32 %v1390, %v1357
      %v1399 = vadd.f32 %v1391, %v1358
      %v1400 = vadd.f32 %v1392, %v1359
      %v1401 = vadd.f32 %v1393, %v1360
      %v1402 = vadd.f32 %v1394, %v1361
      %v1403 = vadd.f32 %v1395, %v1362
      %v1404 = vadd.f32 %v1396, %v1363
      %1405 = vst.msk [vmem:[%s4] sm:$0xff] %vm1380, %v1397
      %1406 = vst.msk [vmem:[%s4 + $0x8] sm:$0xff] %vm1380, %v1398
      %1407 = vst.msk [vmem:[%s4 + $0x10] sm:$0xff] %vm1380, %v1399
      %1408 = vst.msk [vmem:[%s4 + $0x18] sm:$0xff] %vm1380, %v1400
      %1409 = vst.msk [vmem:[%s4 + $0x20] sm:$0xff] %vm1380, %v1401
      %1410 = vst.msk [vmem:[%s4 + $0x28] sm:$0xff] %vm1380, %v1402
      %1411 = vst.msk [vmem:[%s4 + $0x30] sm:$0xff] %vm1380, %v1403
      %1412 = vst.msk [vmem:[%s4 + $0x38] sm:$0xff] %vm1380, %v1404
      // Predicated region
      $region37: #{tpu_custom_call.1} parent=31 // pred_check
        %p1413 = pneg %p97
      $region38: #{tpu_custom_call.1} parent=31 // pred_check_branch
        %1415 = sbr.rel (%p1413) target = $region40
      $region39: #{tpu_custom_call.1} parent=31 // pred_region
        _
      $region40: #{tpu_custom_call.1} parent=31 // pred_fallthru
        _
      // Predicated region
      $region41: #{tpu_custom_call.1} parent=31 // pred_check
        %p1416 = pneg %p118
      $region42: #{tpu_custom_call.1} parent=31 // pred_check_branch
        %1418 = sbr.rel (%p1416) target = $region44
      $region43: #{tpu_custom_call.1} parent=31 // pred_region
        _
      $region44: #{tpu_custom_call.1} parent=31 // pred_fallthru
        _
      // Predicated region
      $region45: #{tpu_custom_call.1} parent=31 // pred_check
        %p1419 = pneg %p97
      $region46: #{tpu_custom_call.1} parent=31 // pred_check_branch
        %1421 = sbr.rel (%p1419) target = $region48
      $region47: #{tpu_custom_call.1} parent=31 // pred_region
        _
      $region48: #{tpu_custom_call.1} parent=31 // pred_fallthru
        _
      // Predicated region
      $region49: #{tpu_custom_call.1} parent=31 // pred_check
        %p1422 = pneg %p118
      $region50: #{tpu_custom_call.1} parent=31 // pred_check_branch
        %1424 = sbr.rel (%p1422) target = $region52
      $region51: #{tpu_custom_call.1} parent=31 // pred_region
        _
      $region52: #{tpu_custom_call.1} parent=31 // pred_fallthru
        _
    $region32: #{tpu_custom_call.1} parent=5 // pred_fallthru
      _
    %p1425 = scmp.le.s32.totalorder 2, %s11
    // Predicated region
    $region53: #{tpu_custom_call.1} parent=5 // pred_check
      %p1426 = pneg %p1425
    $region54: #{tpu_custom_call.1} parent=5 // pred_check_branch
      %1428 = sbr.rel (%p1426) target = $region56
    $region55: #{tpu_custom_call.1} parent=5 // pred_region
      %s1429 = ssub.s32 %s11, 2
    $region56: #{tpu_custom_call.1} parent=5 // pred_fallthru
      _
  $region6: #{tpu_custom_call.1} parent=0 // loop_footer
    %s15 = sadd.s32 1, %s11
  $region7: #{tpu_custom_call.1} parent=0 // loop_footer_branch
    %10 = sbr.rel target = $region3
  $region8: #{tpu_custom_call.1} parent=0 // loop_exit
    _

</llo_original>
